<compile_context>
chip_gen: v6e
topology: v6e:2x2x1
jax: 0.10.0
libtpu: 0.0.40
codegen_flags: <defaults>
</compile_context>

<pallas_src>
import functools

import jax
import jax.numpy as jnp
from jax.experimental import pallas as pl
from jax.experimental.pallas import tpu as pltpu

GROUPS = 32
EPS = 1e-6


# ---------------------------------------------------------------------------
# Pass 1: GroupNorm affine + fused QKV projection (1x1 convs as one matmul).
# ---------------------------------------------------------------------------
def _qkv_kernel(scale_ref, shift_ref, x_ref, wqkv_ref, bqkv_ref,
                q_ref, k_ref, v_ref, *, compute_dtype):
    C = x_ref.shape[-1]
    x = x_ref[0].astype(jnp.float32)                       # (t, C)
    h = x * scale_ref[0] + shift_ref[0]                    # GroupNorm affine (f32 VPU)
    qkv = jnp.dot(h.astype(compute_dtype), wqkv_ref[...],
                  preferred_element_type=jnp.float32) + bqkv_ref[...]   # (t, 3C) f32
    q_ref[0] = qkv[:, :C].astype(q_ref.dtype)              # scale already folded in
    k_ref[0] = qkv[:, C:2 * C].astype(k_ref.dtype)
    v_ref[0] = qkv[:, 2 * C:].astype(v_ref.dtype)


# ---------------------------------------------------------------------------
# Pass 2: flash attention (online softmax over key tiles) + proj_out + residual.
# ---------------------------------------------------------------------------
def _flash_attn_kernel(q_ref, k_ref, v_ref, x_ref, wp_ref, bp_ref, o_ref,
                       m_s, l_s, acc_s, *, compute_dtype):
    ki = pl.program_id(2)

    @pl.when(ki == 0)
    def _():
        m_s[...] = jnp.full_like(m_s, -jnp.inf)
        l_s[...] = jnp.zeros_like(l_s)
        acc_s[...] = jnp.zeros_like(acc_s)

    q = q_ref[0].astype(compute_dtype)                     # (tq, C)
    k = k_ref[0].astype(compute_dtype)                     # (tk, C)
    v = v_ref[0].astype(compute_dtype)                     # (tk, C)

    # s[i, j] = q_i . k_j  (contract last dims; no explicit in-kernel transpose)
    s = jax.lax.dot_general(q, k, (((1,), (1,)), ((), ())),
                            preferred_element_type=jnp.float32)         # (tq, tk)

    m_prev = m_s[...]
    m_new = jnp.maximum(m_prev, jnp.max(s, axis=-1, keepdims=True))
    alpha = jnp.exp(m_prev - m_new)                        # f32
    p = jnp.exp(s - m_new)                                 # f32
    l_s[...] = alpha * l_s[...] + jnp.sum(p, axis=-1, keepdims=True)
    acc_s[...] = alpha * acc_s[...] + jnp.dot(
        p.astype(compute_dtype), v, preferred_element_type=jnp.float32)
    m_s[...] = m_new

    @pl.when(ki == pl.num_programs(2) - 1)
    def _():
        l = l_s[...]
        r = pl.reciprocal(l, approx=True)
        r = r * (2.0 - l * r)                              # one Newton step -> ~f32 1/l
        attn = acc_s[...] * r                              # (tq, C) f32
        proj = jnp.dot(attn.astype(compute_dtype), wp_ref[...],
                       preferred_element_type=jnp.float32) + bp_ref[...]
        o_ref[0] = (x_ref[0].astype(jnp.float32) + proj).astype(o_ref.dtype)


# ---------------------------------------------------------------------------
# Wrapper
# ---------------------------------------------------------------------------
def _pick_tile(n, cap):
    for t in range(min(cap, n), 0, -1):
        if n % t == 0 and (t % 8 == 0 or t == n):
            return t
    return n


def _groupnorm_affine(x_bnc, gamma, beta):
    """Fold GroupNorm(32, C) into per-(batch, channel) scale/shift: gn(x)=x*s+t."""
    B, N, C = x_bnc.shape
    cg = C // GROUPS
    xg = x_bnc.astype(jnp.float32).reshape(B, N, GROUPS, cg)
    mean = jnp.mean(xg, axis=(1, 3), keepdims=True)                 # two-pass stats
    var = jnp.mean(jnp.square(xg - mean), axis=(1, 3), keepdims=True)
    inv = jax.lax.rsqrt(var + EPS)
    mean_c = jnp.broadcast_to(mean, (B, 1, GROUPS, cg)).reshape(B, 1, C)
    inv_c = jnp.broadcast_to(inv, (B, 1, GROUPS, cg)).reshape(B, 1, C)
    g = gamma.reshape(1, 1, C).astype(jnp.float32)
    b = beta.reshape(1, 1, C).astype(jnp.float32)
    scale = inv_c * g
    shift = b - mean_c * scale
    return scale, shift


def _maybe_vmem_limit(est_bytes):
    # Only raise the scoped-VMEM limit when the conservative default (16 MiB on
    # v5e) would be too small; cap at 48 MiB so it also fits v7x's 64 MiB VMEM.
    default_limit = 16 * 1024 * 1024
    if est_bytes <= (default_limit * 3) // 4:
        return None
    return min(max(2 * est_bytes, default_limit), 48 * 1024 * 1024)


def attn_block_pallas(x_nchw, params, *, compute_dtype=jnp.bfloat16,
                      q_tile=256, k_tile=256, proj_tile=512):
    """AttnBlock forward.  x_nchw: (B, C, H, W) float32 -> (B, C, H, W)."""
    B, C, H, W = x_nchw.shape
    N = H * W
    cd = jnp.dtype(compute_dtype)

    # TODO(synk): at production sizes the NCHW<->BNC transposes are an extra HBM
    # round-trip; fuse the layout change into the neighbouring decoder ops.
    x_bnc = jnp.transpose(x_nchw.reshape(B, C, N), (0, 2, 1))        # (B, N, C)

    gamma, beta, wq, bq, wk, bk, wv, bv, wp, bp = params

    # GroupNorm statistics (full-N reduction) -> per-(B, C) affine for the kernels.
    gn_scale, gn_shift = _groupnorm_affine(x_bnc, gamma, beta)

    # Pre-transpose 1x1-conv weights to (C_in, C_out), fuse QKV into (C, 3C),
    # fold the C^-0.5 attention scale into Wq/bq (constant fold, once).
    attn_scale = float(C) ** -0.5
    wqkv = jnp.concatenate([jnp.transpose(wq) * attn_scale,
                            jnp.transpose(wk),
                            jnp.transpose(wv)], axis=1).astype(cd)   # (C, 3C)
    bqkv = jnp.concatenate([bq * attn_scale, bk, bv], axis=1)        # (1, 3C) f32
    wp_t = jnp.transpose(wp).astype(cd)                              # (C, C)

    # ---- pass 1: fused GroupNorm-affine + QKV projection ----
    tp = _pick_tile(N, proj_tile)
    n_tp = N // tp
    qkv_kernel = functools.partial(_qkv_kernel, compute_dtype=cd)
    q, k, v = pl.pallas_call(
        qkv_kernel,
        out_shape=tuple(jax.ShapeDtypeStruct((B, N, C), cd) for _ in range(3)),
        grid_spec=pltpu.PrefetchScalarGridSpec(
            num_scalar_prefetch=0,
            grid=(B, n_tp),
            in_specs=[
                pl.BlockSpec((1, 1, C), lambda b, i: (b, 0, 0)),     # gn scale
                pl.BlockSpec((1, 1, C), lambda b, i: (b, 0, 0)),     # gn shift
                pl.BlockSpec((1, tp, C), lambda b, i: (b, i, 0)),    # x tile
                pl.BlockSpec((C, 3 * C), lambda b, i: (0, 0)),       # W_qkv
                pl.BlockSpec((1, 3 * C), lambda b, i: (0, 0)),       # b_qkv
            ],
            out_specs=tuple(
                pl.BlockSpec((1, tp, C), lambda b, i: (b, i, 0)) for _ in range(3)),
        ),
        compiler_params=pltpu.CompilerParams(
            dimension_semantics=("parallel", "parallel")),
    )(gn_scale, gn_shift, x_bnc, wqkv, bqkv)

    # ---- pass 2: flash attention + proj_out + residual ----
    tq = _pick_tile(N, q_tile)
    tk = _pick_tile(N, k_tile)
    nq, nk = N // tq, N // tk

    est = (2 * (tq * C * cd.itemsize            # q tile (double-buffered)
                + 2 * tk * C * cd.itemsize      # k, v tiles
                + 2 * tq * C * 4)               # x, out tiles (f32)
           + 2 * (C * C * cd.itemsize + C * 4)  # Wp, bp
           + (tq * C + 2 * tq) * 4              # acc/m/l scratch
           + 3 * tq * tk * 4)                   # score working set
    flash_kernel = functools.partial(_flash_attn_kernel, compute_dtype=cd)
    out_bnc = pl.pallas_call(
        flash_kernel,
        out_shape=jax.ShapeDtypeStruct((B, N, C), x_bnc.dtype),
        grid_spec=pltpu.PrefetchScalarGridSpec(
            num_scalar_prefetch=0,
            grid=(B, nq, nk),
            in_specs=[
                pl.BlockSpec((1, tq, C), lambda b, qi, ki: (b, qi, 0)),  # q
                pl.BlockSpec((1, tk, C), lambda b, qi, ki: (b, ki, 0)),  # k
                pl.BlockSpec((1, tk, C), lambda b, qi, ki: (b, ki, 0)),  # v
                pl.BlockSpec((1, tq, C), lambda b, qi, ki: (b, qi, 0)),  # x (residual)
                pl.BlockSpec((C, C), lambda b, qi, ki: (0, 0)),          # Wp
                pl.BlockSpec((1, C), lambda b, qi, ki: (0, 0)),          # bp
            ],
            out_specs=pl.BlockSpec((1, tq, C), lambda b, qi, ki: (b, qi, 0)),
            scratch_shapes=[
                pltpu.VMEM((tq, 1), jnp.float32),    # running max m
                pltpu.VMEM((tq, 1), jnp.float32),    # running denom l
                pltpu.VMEM((tq, C), jnp.float32),    # running numerator acc
            ],
        ),
        compiler_params=pltpu.CompilerParams(
            dimension_semantics=("parallel", "parallel", "arbitrary"),
            vmem_limit_bytes=_maybe_vmem_limit(est)),
    )(q, k, v, x_bnc, wp_t, bp)

    return jnp.transpose(out_bnc, (0, 2, 1)).reshape(B, C, H, W)


# ---------------------------------------------------------------------------
# Pure-JAX reference mirroring the PyTorch forward.
# ---------------------------------------------------------------------------
def attn_block_ref(x_nchw, params):
    gamma, beta, wq, bq, wk, bk, wv, bv, wp, bp = params
    B, C, H, W = x_nchw.shape
    N = H * W
    cg = C // GROUPS
    xg = x_nchw.reshape(B, GROUPS, cg, H, W).astype(jnp.float32)
    mean = jnp.mean(xg, axis=(2, 3, 4), keepdims=True)
    var = jnp.mean((xg - mean) ** 2, axis=(2, 3, 4), keepdims=True)
    h = ((xg - mean) / jnp.sqrt(var + EPS)).reshape(B, C, H, W)
    h = h * gamma.reshape(1, C, 1, 1) + beta.reshape(1, C, 1, 1)

    hc = h.reshape(B, C, N)
    conv = lambda t, w_, b_: jnp.einsum('oc,bcn->bon', w_, t) + b_.reshape(1, C, 1)
    q = conv(hc, wq, bq)
    k = conv(hc, wk, bk)
    v = conv(hc, wv, bv)
    qT = jnp.transpose(q, (0, 2, 1))
    w_ = jnp.einsum('bnc,bcm->bnm', qT, k) * (float(C) ** -0.5)
    w_ = jax.nn.softmax(w_, axis=2)
    h_ = jnp.einsum('bcm,bnm->bcn', v, w_)
    h_ = conv(h_, wp, bp).reshape(B, C, H, W)
    return x_nchw + h_


def init_params(key, C):
    ks = jax.random.split(key, 10)
    scale = 0.05
    gamma = 1.0 + scale * jax.random.normal(ks[0], (1, C), jnp.float32)
    beta = scale * jax.random.normal(ks[1], (1, C), jnp.float32)
    wq = scale * jax.random.normal(ks[2], (C, C), jnp.float32)
    bq = scale * jax.random.normal(ks[3], (1, C), jnp.float32)
    wk = scale * jax.random.normal(ks[4], (C, C), jnp.float32)
    bk = scale * jax.random.normal(ks[5], (1, C), jnp.float32)
    wv = scale * jax.random.normal(ks[6], (C, C), jnp.float32)
    bv = scale * jax.random.normal(ks[7], (1, C), jnp.float32)
    wp = scale * jax.random.normal(ks[8], (C, C), jnp.float32)
    bp = scale * jax.random.normal(ks[9], (1, C), jnp.float32)
    return (gamma, beta, wq, bq, wk, bk, wv, bv, wp, bp)


if __name__ == "__main__":
    key = jax.random.PRNGKey(0)
    kx, kp = jax.random.split(key)

    # Small but representative: C=128 keeps the lane dim a full vreg width,
    # H=W=16 -> N=256 so 128-wide q/k tiles exercise the online softmax
    # (2 query tiles x 2 key tiles per batch element).
    B, C, H, W = 2, 128, 16, 16
    x = jax.random.normal(kx, (B, C, H, W), jnp.float32)
    params = init_params(kp, C)

    ref = jax.block_until_ready(attn_block_ref(x, params))

    # f32 MXU path (tight tolerance).
    out_f32 = jax.block_until_ready(
        attn_block_pallas(x, params, compute_dtype=jnp.float32,
                          q_tile=128, k_tile=128))
    if not jnp.allclose(out_f32, ref, rtol=1e-3, atol=1e-3):
        err = jnp.max(jnp.abs(out_f32 - ref))
        raise AssertionError(f"f32 Pallas AttnBlock mismatch vs reference (max abs err={err})")

    # bf16 MXU path (f32 accumulation; looser tolerance appropriate for bf16).
    out_bf16 = jax.block_until_ready(
        attn_block_pallas(x, params, compute_dtype=jnp.bfloat16,
                          q_tile=128, k_tile=128))
    if not jnp.allclose(out_bf16, ref, rtol=2.5e-2, atol=2.5e-2):
        err = jnp.max(jnp.abs(out_bf16 - ref))
        raise AssertionError(f"bf16 Pallas AttnBlock mismatch vs reference (max abs err={err})")

    print("KERNEL_OK")
</pallas_src>

<mosaic_0001>
module attributes {stable_mosaic.version = 11 : i64} {
  func.func @_qkv_kernel(%arg0: i32, %arg1: i32, %arg2: memref<1x1x128xf32, #tpu.memory_space<vmem>>, %arg3: memref<1x1x128xf32, #tpu.memory_space<vmem>>, %arg4: memref<1x256x128xf32, #tpu.memory_space<vmem>>, %arg5: memref<128x384xf32, #tpu.memory_space<vmem>>, %arg6: memref<1x384xf32, #tpu.memory_space<vmem>>, %arg7: memref<1x256x128xf32, #tpu.memory_space<vmem>>, %arg8: memref<1x256x128xf32, #tpu.memory_space<vmem>>, %arg9: memref<1x256x128xf32, #tpu.memory_space<vmem>>) attributes {dimension_semantics = [#tpu.dimension_semantics<parallel>, #tpu.dimension_semantics<parallel>], iteration_bounds = array<i64: 2, 1>, scalar_prefetch = 0 : i64, scratch_operands = 0 : i64, tpu.core_type = #tpu.core_type<tc>, window_params = [{transform_indices = @transform_0, window_bounds = array<i64: 1, 1, 128>}, {transform_indices = @transform_1, window_bounds = array<i64: 1, 1, 128>}, {transform_indices = @transform_2, window_bounds = array<i64: 1, 256, 128>}, {pipeline_mode = #tpu.pipeline_mode<synchronous>, transform_indices = @transform_3, window_bounds = array<i64: 128, 384>}, {pipeline_mode = #tpu.pipeline_mode<synchronous>, transform_indices = @transform_4, window_bounds = array<i64: 1, 384>}, {transform_indices = @transform_5, window_bounds = array<i64: 1, 256, 128>}, {transform_indices = @transform_6, window_bounds = array<i64: 1, 256, 128>}, {transform_indices = @transform_7, window_bounds = array<i64: 1, 256, 128>}]} {
    %c0 = arith.constant 0 : index
    %c0_0 = arith.constant 0 : index
    %c0_1 = arith.constant 0 : index
    %0 = vector.load %arg4[%c0, %c0_0, %c0_1] : memref<1x256x128xf32, #tpu.memory_space<vmem>>, vector<1x256x128xf32>
    %1 = vector.shape_cast %0 : vector<1x256x128xf32> to vector<256x128xf32>
    %c0_2 = arith.constant 0 : index
    %c0_3 = arith.constant 0 : index
    %c0_4 = arith.constant 0 : index
    %2 = vector.load %arg2[%c0_2, %c0_3, %c0_4] : memref<1x1x128xf32, #tpu.memory_space<vmem>>, vector<1x1x128xf32>
    %3 = vector.shape_cast %2 : vector<1x1x128xf32> to vector<1x128xf32>
    %4 = vector.broadcast %3 : vector<1x128xf32> to vector<256x128xf32>
    %5 = arith.mulf %1, %4 : vector<256x128xf32>
    %c0_5 = arith.constant 0 : index
    %c0_6 = arith.constant 0 : index
    %c0_7 = arith.constant 0 : index
    %6 = vector.load %arg3[%c0_5, %c0_6, %c0_7] : memref<1x1x128xf32, #tpu.memory_space<vmem>>, vector<1x1x128xf32>
    %7 = vector.shape_cast %6 : vector<1x1x128xf32> to vector<1x128xf32>
    %8 = vector.broadcast %7 : vector<1x128xf32> to vector<256x128xf32>
    %9 = arith.addf %5, %8 : vector<256x128xf32>
    %c0_8 = arith.constant 0 : index
    %c0_9 = arith.constant 0 : index
    %10 = vector.load %arg5[%c0_8, %c0_9] : memref<128x384xf32, #tpu.memory_space<vmem>>, vector<128x384xf32>
    %cst = arith.constant dense<0.000000e+00> : vector<256x384xf32>
    %11 = tpu.matmul %9, %10, %cst {dimension_numbers = #tpu.dot_dimension_numbers<[1], [0], [0], [1], [0, 0, 1, 1], [], []>} : vector<256x128xf32>, vector<128x384xf32>, vector<256x384xf32> -> vector<256x384xf32>
    %c0_10 = arith.constant 0 : index
    %c0_11 = arith.constant 0 : index
    %12 = vector.load %arg6[%c0_10, %c0_11] : memref<1x384xf32, #tpu.memory_space<vmem>>, vector<1x384xf32>
    %13 = vector.broadcast %12 : vector<1x384xf32> to vector<256x384xf32>
    %14 = arith.addf %11, %13 : vector<256x384xf32>
    %15 = vector.extract_strided_slice %14 {offsets = [0, 0], sizes = [256, 128], strides = [1, 1]} : vector<256x384xf32> to vector<256x128xf32>
    %c0_12 = arith.constant 0 : index
    %c0_13 = arith.constant 0 : index
    %c0_14 = arith.constant 0 : index
    %16 = vector.load %arg7[%c0_12, %c0_13, %c0_14] : memref<1x256x128xf32, #tpu.memory_space<vmem>>, vector<1x256x128xf32>
    %17 = vector.shape_cast %16 : vector<1x256x128xf32> to vector<256x128xf32>
    %18 = vector.shape_cast %15 : vector<256x128xf32> to vector<1x256x128xf32>
    tpu.vector_store %arg7[%c0_12, %c0_13, %c0_14], %18 {strides = array<i32>} : memref<1x256x128xf32, #tpu.memory_space<vmem>>, vector<1x256x128xf32>,
    %19 = vector.extract_strided_slice %14 {offsets = [0, 128], sizes = [256, 128], strides = [1, 1]} : vector<256x384xf32> to vector<256x128xf32>
    %c0_15 = arith.constant 0 : index
    %c0_16 = arith.constant 0 : index
    %c0_17 = arith.constant 0 : index
    %20 = vector.load %arg8[%c0_15, %c0_16, %c0_17] : memref<1x256x128xf32, #tpu.memory_space<vmem>>, vector<1x256x128xf32>
    %21 = vector.shape_cast %20 : vector<1x256x128xf32> to vector<256x128xf32>
    %22 = vector.shape_cast %19 : vector<256x128xf32> to vector<1x256x128xf32>
    tpu.vector_store %arg8[%c0_15, %c0_16, %c0_17], %22 {strides = array<i32>} : memref<1x256x128xf32, #tpu.memory_space<vmem>>, vector<1x256x128xf32>,
    %23 = vector.extract_strided_slice %14 {offsets = [0, 256], sizes = [256, 128], strides = [1, 1]} : vector<256x384xf32> to vector<256x128xf32>
    %c0_18 = arith.constant 0 : index
    %c0_19 = arith.constant 0 : index
    %c0_20 = arith.constant 0 : index
    %24 = vector.load %arg9[%c0_18, %c0_19, %c0_20] : memref<1x256x128xf32, #tpu.memory_space<vmem>>, vector<1x256x128xf32>
    %25 = vector.shape_cast %24 : vector<1x256x128xf32> to vector<256x128xf32>
    %26 = vector.shape_cast %23 : vector<256x128xf32> to vector<1x256x128xf32>
    tpu.vector_store %arg9[%c0_18, %c0_19, %c0_20], %26 {strides = array<i32>} : memref<1x256x128xf32, #tpu.memory_space<vmem>>, vector<1x256x128xf32>,
    return
  }
  func.func @transform_0(%arg0: i32, %arg1: i32) -> (i32, i32, i32) {
    %c0_i32 = arith.constant 0 : i32
    %c0_i32_0 = arith.constant 0 : i32
    %c0_i32_1 = arith.constant 0 : i32
    return %arg0, %c0_i32, %c0_i32_0 : i32, i32, i32
  }
  func.func @transform_1(%arg0: i32, %arg1: i32) -> (i32, i32, i32) {
    %c0_i32 = arith.constant 0 : i32
    %c0_i32_0 = arith.constant 0 : i32
    %c0_i32_1 = arith.constant 0 : i32
    return %arg0, %c0_i32, %c0_i32_0 : i32, i32, i32
  }
  func.func @transform_2(%arg0: i32, %arg1: i32) -> (i32, i32, i32) {
    %c0_i32 = arith.constant 0 : i32
    %c0_i32_0 = arith.constant 0 : i32
    return %arg0, %arg1, %c0_i32 : i32, i32, i32
  }
  func.func @transform_3(%arg0: i32, %arg1: i32) -> (i32, i32) {
    %c0_i32 = arith.constant 0 : i32
    %c0_i32_0 = arith.constant 0 : i32
    %c0_i32_1 = arith.constant 0 : i32
    return %c0_i32, %c0_i32_0 : i32, i32
  }
  func.func @transform_4(%arg0: i32, %arg1: i32) -> (i32, i32) {
    %c0_i32 = arith.constant 0 : i32
    %c0_i32_0 = arith.constant 0 : i32
    %c0_i32_1 = arith.constant 0 : i32
    return %c0_i32, %c0_i32_0 : i32, i32
  }
  func.func @transform_5(%arg0: i32, %arg1: i32) -> (i32, i32, i32) {
    %c0_i32 = arith.constant 0 : i32
    %c0_i32_0 = arith.constant 0 : i32
    return %arg0, %arg1, %c0_i32 : i32, i32, i32
  }
  func.func @transform_6(%arg0: i32, %arg1: i32) -> (i32, i32, i32) {
    %c0_i32 = arith.constant 0 : i32
    %c0_i32_0 = arith.constant 0 : i32
    return %arg0, %arg1, %c0_i32 : i32, i32, i32
  }
  func.func @transform_7(%arg0: i32, %arg1: i32) -> (i32, i32, i32) {
    %c0_i32 = arith.constant 0 : i32
    %c0_i32_0 = arith.constant 0 : i32
    return %arg0, %arg1, %c0_i32 : i32, i32, i32
  }
}

</mosaic_0001>

<llo_original>
// kernel: tpu_custom_call.1
$region0: #{tpu_custom_call.1}
  #allocation0 [shape = 'u32[]', space=smem, size = 0x4, offset = 0x4, fixed_abs, tag = 'smem constant byte address 0x4 - core index']
  #allocation1 [shape = 'u32[144,128]{1,0:T(1,128)}', space=vmem, size = 0x12000, scoped, tag = 'internal scratch']
  %s0 = inlined_call_operand.hbm [shape: f32[2,1,128], index: 0, kind: input, shape index: {}]
  %s1 = inlined_call_operand.hbm [shape: f32[2,1,128], index: 1, kind: input, shape index: {}]
  %s2 = inlined_call_operand.hbm [shape: f32[2,256,128], index: 2, kind: input, shape index: {}]
  %s3 = inlined_call_operand.hbm [shape: f32[128,384], index: 3, kind: input, shape index: {}]
  %s4 = inlined_call_operand.vmem [shape: f32[1,384], index: 4, kind: input, shape index: {}]
  %s5 = inlined_call_operand.hbm [shape: f32[2,256,128], index: 5, kind: output, shape index: {0}]
  %s6 = inlined_call_operand.hbm [shape: f32[2,256,128], index: 6, kind: output, shape index: {1}]
  %s7 = inlined_call_operand.hbm [shape: f32[2,256,128], index: 7, kind: output, shape index: {2}]
  %8 = xla_tuple %s5, %s6, %s7
  %s9 = sld [smem:[#allocation0]]
  $region85: #{tpu_custom_call.1} parent=0
    _
  %s11 = ssub.s32 1, %s9
  %s12 = scalar_select 0, %s11, %s9
  $region1: #{tpu_custom_call.1} parent=0
    #allocation2 [shape = 'u8[1024]{0}', space=vmem, size = 0x400, scoped, tag = 'input window, operand 0']
    #allocation3 [shape = 's32[2]{0}', space=sflag, size = 0x8, scoped, tag = 'scoped memory for tpu_custom_call.1']
    #allocation4 [shape = 's32[2]{0}', space=sflag, size = 0x8, scoped, tag = 'scoped memory for tpu_custom_call.1']
    #allocation5 [shape = 'u8[1024]{0}', space=vmem, size = 0x400, scoped, tag = 'input window, operand 1']
    #allocation6 [shape = 's32[2]{0}', space=sflag, size = 0x8, scoped, tag = 'scoped memory for tpu_custom_call.1']
    #allocation7 [shape = 'u8[262144]{0}', space=vmem, size = 0x40000, scoped, tag = 'input window, operand 2']
    #allocation8 [shape = 'u8[196608]{0}', space=vmem, size = 0x30000, scoped, tag = 'input window, operand 3, single buffered']
    #allocation9 [shape = 's32[1]{0}', space=sflag, size = 0x4, scoped, tag = 'scoped memory for tpu_custom_call.1']
    #allocation10 [shape = 'u8[262144]{0}', space=vmem, size = 0x40000, scoped, tag = 'output window, operand 0']
    #allocation11 [shape = 'u8[262144]{0}', space=vmem, size = 0x40000, scoped, tag = 'output window, operand 1']
    #allocation12 [shape = 's32[2]{0}', space=sflag, size = 0x8, scoped, tag = 'scoped memory for tpu_custom_call.1']
    #allocation13 [shape = 'u8[262144]{0}', space=vmem, size = 0x40000, scoped, tag = 'output window, operand 2']
    %13 = vsyncpa [#allocation3], 0
    %s14 = scalar_lea.sflag [#allocation3], 1
    %15 = vsyncpa %s14, 0
    %16 = vsyncpa [#allocation6], 0
    %s17 = scalar_lea.sflag [#allocation6], 1
    %18 = vsyncpa %s17, 0
    %19 = vsyncpa [#allocation9], 0
    %20 = vsyncpa [#allocation4], 0
    %s21 = scalar_lea.sflag [#allocation4], 1
    %22 = vsyncpa %s21, 0
    %23 = vsyncpa [#allocation12], 0
    %s24 = scalar_lea.sflag [#allocation12], 1
    %25 = vsyncpa %s24, 0
    loop: start=0, step=1, limit=4
    $region2: #{tpu_custom_call.1} parent=1 // loop_pre_header
      _
    $region3: #{tpu_custom_call.1} parent=1 // loop_header
      %s27 = sphi 0, %s31
      %p28 = scmp.ge.s32.totalorder %s27, 4
      %s34 = sphi 0, %s46
      %s35 = sphi 0, %s42
      %s36 = sphi 0, %s34
      %s37 = sphi 0, %s35
      %s38 = sphi 0, %s36
      %s39 = sphi 0, %s37
      %s49 = sphi 0, %s51
      %s52 = sphi 0, %s49
      %s53 = sphi 0, %s52
      %s69 = sphi 0, %s53
      %s75 = sphi 0, %s77
      %s78 = sphi 0, %s75
      %s79 = sphi 0, %s78
      %s95 = sphi 0, %s79
      %s103 = sphi 0, %s105
      %s106 = sphi 0, %s103
      %s107 = sphi 0, %s106
      %s123 = sphi 0, %s107
      %s127 = sphi 0, %s127
      %s129 = sphi 0, %s127
      %s130 = sphi 0, %s129
      %s144 = sphi 0, %s130
      %s148 = sphi 0, %s148
      %s150 = sphi 0, %s148
      %s151 = sphi 0, %s150
      %s165 = sphi 0, %s151
      %s173 = sphi 0, %s175
      %s176 = sphi 0, %s173
      %s177 = sphi 0, %s176
      %s193 = sphi 0, %s177
      %s201 = sphi 0, %s203
      %s204 = sphi 0, %s201
      %s205 = sphi 0, %s204
      %s221 = sphi 0, %s205
      %s229 = sphi 0, %s231
      %s232 = sphi 0, %s229
      %s233 = sphi 0, %s232
      %s249 = sphi 0, %s233
    $region4: #{tpu_custom_call.1} parent=1 // loop_header_branch
      %30 = sbr.rel (%p28) target = $region8
    $region5: #{tpu_custom_call.1} parent=1 // loop_body
      %s32 = ssub.s32 %s27, 1
      %s33 = ssub.s32 %s27, 2
      %s40 = sadd.s32 1, %s35
      %p41 = scmp.ge.s32.totalorder %s40, 1
      %s42 = scalar_select %p41, 0, %s40
      %s43 = sadd.s32 1, %s34
      %s44 = scalar_select %p41, %s43, %s34
      %p45 = scmp.ge.s32.totalorder %s44, 2
      %s46 = scalar_select %p45, 0, %s44
      %s47 = ssub.s32 %s34, %s46
      %p48 = scmp.eq.s32.totalorder %s47, 0
      %s50 = sadd.s32 %s49, 1
      %s51 = scalar_select %p48, %s49, %s50
      %p54 = pneg %p48
      %p55 = scmp.eq.s32.totalorder %s27, 1
      %p56 = por %p54, %p55
      %p57 = scmp.ne.s32.totalorder %s49, %s52
      %p58 = scmp.eq.s32.totalorder %s27, 0
      %p59 = por %p57, %p58
      %p60 = scmp.ne.s32.totalorder %s49, %s52
      %p61 = scmp.eq.s32.totalorder %s32, 1
      %p62 = por %p60, %p61
      %p63 = scmp.ne.s32.totalorder %s52, %s53
      %p64 = scmp.eq.s32.totalorder %s32, 0
      %p65 = por %p63, %p64
      %p66 = scmp.ne.s32.totalorder %s52, %s53
      %p67 = scmp.eq.s32.totalorder %s33, 1
      %p68 = por %p66, %p67
      %p70 = scmp.ne.s32.totalorder %s53, %s69
      %p71 = scmp.eq.s32.totalorder %s33, 0
      %p72 = por %p70, %p71
      %s73 = ssub.s32 %s34, %s46
      %p74 = scmp.eq.s32.totalorder %s73, 0
      %s76 = sadd.s32 %s75, 1
      %s77 = scalar_select %p74, %s75, %s76
      %p80 = pneg %p74
      %p81 = scmp.eq.s32.totalorder %s27, 1
      %p82 = por %p80, %p81
      %p83 = scmp.ne.s32.totalorder %s75, %s78
      %p84 = scmp.eq.s32.totalorder %s27, 0
      %p85 = por %p83, %p84
      %p86 = scmp.ne.s32.totalorder %s75, %s78
      %p87 = scmp.eq.s32.totalorder %s32, 1
      %p88 = por %p86, %p87
      %p89 = scmp.ne.s32.totalorder %s78, %s79
      %p90 = scmp.eq.s32.totalorder %s32, 0
      %p91 = por %p89, %p90
      %p92 = scmp.ne.s32.totalorder %s78, %s79
      %p93 = scmp.eq.s32.totalorder %s33, 1
      %p94 = por %p92, %p93
      %p96 = scmp.ne.s32.totalorder %s79, %s95
      %p97 = scmp.eq.s32.totalorder %s33, 0
      %p98 = por %p96, %p97
      %s99 = ssub.s32 %s34, %s46
      %s100 = ssub.s32 %s35, %s42
      %s101 = sor.u32 %s99, %s100
      %p102 = scmp.eq.s32.totalorder %s101, 0
      %s104 = sadd.s32 %s103, 1
      %s105 = scalar_select %p102, %s103, %s104
      %p108 = pneg %p102
      %p109 = scmp.eq.s32.totalorder %s27, 1
      %p110 = por %p108, %p109
      %p111 = scmp.ne.s32.totalorder %s103, %s106
      %p112 = scmp.eq.s32.totalorder %s27, 0
      %p113 = por %p111, %p112
      %p114 = scmp.ne.s32.totalorder %s103, %s106
      %p115 = scmp.eq.s32.totalorder %s32, 1
      %p116 = por %p114, %p115
      %p117 = scmp.ne.s32.totalorder %s106, %s107
      %p118 = scmp.eq.s32.totalorder %s32, 0
      %p119 = por %p117, %p118
      %p120 = scmp.ne.s32.totalorder %s106, %s107
      %p121 = scmp.eq.s32.totalorder %s33, 1
      %p122 = por %p120, %p121
      %p124 = scmp.ne.s32.totalorder %s107, %s123
      %p125 = scmp.eq.s32.totalorder %s33, 0
      %p126 = por %p124, %p125
      %s128 = sadd.s32 %s127, 1
      %p131 = scmp.eq.s32.totalorder %s27, 1
      %p132 = scmp.ne.s32.totalorder %s127, %s129
      %p133 = scmp.eq.s32.totalorder %s27, 0
      %p134 = por %p132, %p133
      %p135 = scmp.ne.s32.totalorder %s127, %s129
      %p136 = scmp.eq.s32.totalorder %s32, 1
      %p137 = por %p135, %p136
      %p138 = scmp.ne.s32.totalorder %s129, %s130
      %p139 = scmp.eq.s32.totalorder %s32, 0
      %p140 = por %p138, %p139
      %p141 = scmp.ne.s32.totalorder %s129, %s130
      %p142 = scmp.eq.s32.totalorder %s33, 1
      %p143 = por %p141, %p142
      %p145 = scmp.ne.s32.totalorder %s130, %s144
      %p146 = scmp.eq.s32.totalorder %s33, 0
      %p147 = por %p145, %p146
      %s149 = sadd.s32 %s148, 1
      %p152 = scmp.eq.s32.totalorder %s27, 1
      %p153 = scmp.ne.s32.totalorder %s148, %s150
      %p154 = scmp.eq.s32.totalorder %s27, 0
      %p155 = por %p153, %p154
      %p156 = scmp.ne.s32.totalorder %s148, %s150
      %p157 = scmp.eq.s32.totalorder %s32, 1
      %p158 = por %p156, %p157
      %p159 = scmp.ne.s32.totalorder %s150, %s151
      %p160 = scmp.eq.s32.totalorder %s32, 0
      %p161 = por %p159, %p160
      %p162 = scmp.ne.s32.totalorder %s150, %s151
      %p163 = scmp.eq.s32.totalorder %s33, 1
      %p164 = por %p162, %p163
      %p166 = scmp.ne.s32.totalorder %s151, %s165
      %p167 = scmp.eq.s32.totalorder %s33, 0
      %p168 = por %p166, %p167
      %s169 = ssub.s32 %s34, %s46
      %s170 = ssub.s32 %s35, %s42
      %s171 = sor.u32 %s169, %s170
      %p172 = scmp.eq.s32.totalorder %s171, 0
      %s174 = sadd.s32 %s173, 1
      %s175 = scalar_select %p172, %s173, %s174
      %p178 = pneg %p172
      %p179 = scmp.eq.s32.totalorder %s27, 1
      %p180 = por %p178, %p179
      %p181 = scmp.ne.s32.totalorder %s173, %s176
      %p182 = scmp.eq.s32.totalorder %s27, 0
      %p183 = por %p181, %p182
      %p184 = scmp.ne.s32.totalorder %s173, %s176
      %p185 = scmp.eq.s32.totalorder %s32, 1
      %p186 = por %p184, %p185
      %p187 = scmp.ne.s32.totalorder %s176, %s177
      %p188 = scmp.eq.s32.totalorder %s32, 0
      %p189 = por %p187, %p188
      %p190 = scmp.ne.s32.totalorder %s176, %s177
      %p191 = scmp.eq.s32.totalorder %s33, 1
      %p192 = por %p190, %p191
      %p194 = scmp.ne.s32.totalorder %s177, %s193
      %p195 = scmp.eq.s32.totalorder %s33, 0
      %p196 = por %p194, %p195
      %s197 = ssub.s32 %s34, %s46
      %s198 = ssub.s32 %s35, %s42
      %s199 = sor.u32 %s197, %s198
      %p200 = scmp.eq.s32.totalorder %s199, 0
      %s202 = sadd.s32 %s201, 1
      %s203 = scalar_select %p200, %s201, %s202
      %p206 = pneg %p200
      %p207 = scmp.eq.s32.totalorder %s27, 1
      %p208 = por %p206, %p207
      %p209 = scmp.ne.s32.totalorder %s201, %s204
      %p210 = scmp.eq.s32.totalorder %s27, 0
      %p211 = por %p209, %p210
      %p212 = scmp.ne.s32.totalorder %s201, %s204
      %p213 = scmp.eq.s32.totalorder %s32, 1
      %p214 = por %p212, %p213
      %p215 = scmp.ne.s32.totalorder %s204, %s205
      %p216 = scmp.eq.s32.totalorder %s32, 0
      %p217 = por %p215, %p216
      %p218 = scmp.ne.s32.totalorder %s204, %s205
      %p219 = scmp.eq.s32.totalorder %s33, 1
      %p220 = por %p218, %p219
      %p222 = scmp.ne.s32.totalorder %s205, %s221
      %p223 = scmp.eq.s32.totalorder %s33, 0
      %p224 = por %p222, %p223
      %s225 = ssub.s32 %s34, %s46
      %s226 = ssub.s32 %s35, %s42
      %s227 = sor.u32 %s225, %s226
      %p228 = scmp.eq.s32.totalorder %s227, 0
      %s230 = sadd.s32 %s229, 1
      %s231 = scalar_select %p228, %s229, %s230
      %p234 = pneg %p228
      %p235 = scmp.eq.s32.totalorder %s27, 1
      %p236 = por %p234, %p235
      %p237 = scmp.ne.s32.totalorder %s229, %s232
      %p238 = scmp.eq.s32.totalorder %s27, 0
      %p239 = por %p237, %p238
      %p240 = scmp.ne.s32.totalorder %s229, %s232
      %p241 = scmp.eq.s32.totalorder %s32, 1
      %p242 = por %p240, %p241
      %p243 = scmp.ne.s32.totalorder %s232, %s233
      %p244 = scmp.eq.s32.totalorder %s32, 0
      %p245 = por %p243, %p244
      %p246 = scmp.ne.s32.totalorder %s232, %s233
      %p247 = scmp.eq.s32.totalorder %s33, 1
      %p248 = por %p246, %p247
      %p250 = scmp.ne.s32.totalorder %s233, %s249
      %p251 = scmp.eq.s32.totalorder %s33, 0
      %p252 = por %p250, %p251
      %p253 = scmp.le.s32.totalorder 1, %s27
      %p254 = scmp.lt.s32.totalorder %s27, 3
      %p255 = pnand %p253, %p254
      %p256 = pneg %p255
      // Predicated region
      $region9: #{tpu_custom_call.1} parent=5 // pred_check
        _
      $region10: #{tpu_custom_call.1} parent=5 // pred_check_branch
        %258 = sbr.rel (%p255) target = $region12
      $region11: #{tpu_custom_call.1} parent=5 // pred_region
        %s259 = ssub.s32 %s27, 1
        // Predicated region
        $region13: #{tpu_custom_call.1} parent=11 // pred_check
          %p260 = pneg %p140
        $region14: #{tpu_custom_call.1} parent=11 // pred_check_branch
          %262 = sbr.rel (%p260) target = $region16
        $region15: #{tpu_custom_call.1} parent=11 // pred_region
          %s264 = ssub.s32 6144, 6144
          %265 = vsyncadd [#allocation9], %s264
          %s266 = sshll.u32 [#allocation8], 4
          %s267 = int_to_ptr.vmem [resolvable:$true] %s266
          %272 = dma.hbm_to_vmem [thread:$0]  %s3, 6144, %s267, [#allocation9], 384, 384, 24
        $region16: #{tpu_custom_call.1} parent=11 // pred_fallthru
          _
        // Predicated region
        $region17: #{tpu_custom_call.1} parent=11 // pred_check
          %p273 = pneg %p161
        $region18: #{tpu_custom_call.1} parent=11 // pred_check_branch
          %275 = sbr.rel (%p273) target = $region20
        $region19: #{tpu_custom_call.1} parent=11 // pred_region
          _
        $region20: #{tpu_custom_call.1} parent=11 // pred_fallthru
          _
      $region12: #{tpu_custom_call.1} parent=5 // pred_fallthru
        _
      %p276 = scmp.lt.s32.totalorder %s27, 2
      // Predicated region
      $region21: #{tpu_custom_call.1} parent=5 // pred_check
        %p277 = pneg %p276
      $region22: #{tpu_custom_call.1} parent=5 // pred_check_branch
        %279 = sbr.rel (%p277) target = $region24
      $region23: #{tpu_custom_call.1} parent=5 // pred_region
        // Predicated region
        $region25: #{tpu_custom_call.1} parent=23 // pred_check
          %p280 = pneg %p59
        $region26: #{tpu_custom_call.1} parent=23 // pred_check_branch
          %282 = sbr.rel (%p280) target = $region28
        $region27: #{tpu_custom_call.1} parent=23 // pred_region
          %s283 = sand.u32 %s49, 1
          %s284 = scalar_lea.sflag [#allocation3], %s283
          %s285 = sand.u32 %s49, 1
          %s286 = scalar_lea.vmem [#allocation2], %s285
          %s288 = ssub.s32 16, 16
          %289 = vsyncadd %s284, %s288
          %s290 = smul.addr %s34, 16
          %s291 = scalar_lea.hbm %s0, %s290
          %s293 = sshll.u32 %s286, 4
          %s294 = int_to_ptr.vmem [resolvable:$true] %s293
          %296 = dma.hbm_to_vmem [thread:$0]  %s291, 16, %s294, %s284
        $region28: #{tpu_custom_call.1} parent=23 // pred_fallthru
          _
        // Predicated region
        $region29: #{tpu_custom_call.1} parent=23 // pred_check
          %p297 = pneg %p85
        $region30: #{tpu_custom_call.1} parent=23 // pred_check_branch
          %299 = sbr.rel (%p297) target = $region32
        $region31: #{tpu_custom_call.1} parent=23 // pred_region
          %s300 = sand.u32 %s27, 1
          %s301 = scalar_lea.sflag [#allocation6], %s300
          %s302 = sand.u32 %s75, 1
          %s303 = scalar_lea.vmem [#allocation5], %s302
          %s305 = ssub.s32 16, 16
          %306 = vsyncadd %s301, %s305
          %s307 = smul.addr %s34, 16
          %s308 = scalar_lea.hbm %s1, %s307
          %s310 = sshll.u32 %s303, 4
          %s311 = int_to_ptr.vmem [resolvable:$true] %s310
          %313 = dma.hbm_to_vmem [thread:$0]  %s308, 16, %s311, %s301
        $region32: #{tpu_custom_call.1} parent=23 // pred_fallthru
          _
        // Predicated region
        $region33: #{tpu_custom_call.1} parent=23 // pred_check
          %p314 = pneg %p113
        $region34: #{tpu_custom_call.1} parent=23 // pred_check_branch
          %316 = sbr.rel (%p314) target = $region36
        $region35: #{tpu_custom_call.1} parent=23 // pred_region
          %s317 = sand.u32 %s27, 1
          %s318 = scalar_lea.sflag [#allocation6], %s317
          %s319 = sand.u32 %s103, 1
          %s320 = smul.addr %s319, 256
          %s321 = scalar_lea.vmem [#allocation7], %s320
          %s322 = smul.u32 32, %s35
          %s324 = ssub.s32 4096, 4096
          %325 = vsyncadd %s318, %s324
          %s326 = smul.addr %s34, 32
          %s327 = sadd.s32 %s322, %s326
          %s328 = smul.addr %s327, 128
          %s329 = scalar_lea.hbm %s2, %s328
          %s330 = sshll.u32 %s321, 4
          %s331 = int_to_ptr.vmem [resolvable:$true] %s330
          %336 = dma.hbm_to_vmem [thread:$0]  %s329, 4096, %s331, %s318, 128, 128, 8
        $region36: #{tpu_custom_call.1} parent=23 // pred_fallthru
          _
      $region24: #{tpu_custom_call.1} parent=5 // pred_fallthru
        _
      %p337 = scmp.le.s32.totalorder 1, %s27
      %p338 = scmp.lt.s32.totalorder %s27, 3
      %p339 = pnand %p337, %p338
      %p340 = pneg %p339
      // Predicated region
      $region37: #{tpu_custom_call.1} parent=5 // pred_check
        _
      $region38: #{tpu_custom_call.1} parent=5 // pred_check_branch
        %342 = sbr.rel (%p339) target = $region40
      $region39: #{tpu_custom_call.1} parent=5 // pred_region
        %s343 = ssub.s32 %s27, 1
        %s344 = sand.u32 %s52, 1
        %s345 = scalar_lea.sflag [#allocation3], %s344
        %s346 = sand.u32 %s52, 1
        %s347 = scalar_lea.vmem [#allocation2], %s346
        // Predicated region
        $region41: #{tpu_custom_call.1} parent=39 // pred_check
          %p348 = pneg %p65
        $region42: #{tpu_custom_call.1} parent=39 // pred_check_branch
          %350 = sbr.rel (%p348) target = $region44
        $region43: #{tpu_custom_call.1} parent=39 // pred_region
          %351 = dma.done %s345, 16
        $region44: #{tpu_custom_call.1} parent=39 // pred_fallthru
          _
        %s352 = sand.u32 %s32, 1
        %s353 = scalar_lea.sflag [#allocation6], %s352
        %s354 = sand.u32 %s78, 1
        %s355 = scalar_lea.vmem [#allocation5], %s354
        // Predicated region
        $region45: #{tpu_custom_call.1} parent=39 // pred_check
          %p356 = pneg %p91
        $region46: #{tpu_custom_call.1} parent=39 // pred_check_branch
          %358 = sbr.rel (%p356) target = $region48
        $region47: #{tpu_custom_call.1} parent=39 // pred_region
          %359 = dma.done %s353, 16
        $region48: #{tpu_custom_call.1} parent=39 // pred_fallthru
          _
        %s360 = sand.u32 %s32, 1
        %s361 = scalar_lea.sflag [#allocation6], %s360
        %s362 = sand.u32 %s106, 1
        %s363 = smul.addr %s362, 256
        %s364 = scalar_lea.vmem [#allocation7], %s363
        // Predicated region
        $region49: #{tpu_custom_call.1} parent=39 // pred_check
          %p365 = pneg %p119
        $region50: #{tpu_custom_call.1} parent=39 // pred_check_branch
          %367 = sbr.rel (%p365) target = $region52
        $region51: #{tpu_custom_call.1} parent=39 // pred_region
          %368 = dma.done %s361, 4096
        $region52: #{tpu_custom_call.1} parent=39 // pred_fallthru
          _
        // Predicated region
        $region53: #{tpu_custom_call.1} parent=39 // pred_check
          %p369 = pneg %p140
        $region54: #{tpu_custom_call.1} parent=39 // pred_check_branch
          %371 = sbr.rel (%p369) target = $region56
        $region55: #{tpu_custom_call.1} parent=39 // pred_region
          %372 = dma.done [#allocation9], 6144
        $region56: #{tpu_custom_call.1} parent=39 // pred_fallthru
          _
        %s373 = sand.u32 %s52, 1
        %s374 = scalar_lea.sflag [#allocation3], %s373
        %s375 = sand.u32 %s52, 1
        %s376 = scalar_lea.vmem [#allocation2], %s375
        %p377 = pneg %p65
        %p378 = pneg %p62
        %s379 = sand.u32 %s32, 1
        %s380 = scalar_lea.sflag [#allocation6], %s379
        %s381 = sand.u32 %s78, 1
        %s382 = scalar_lea.vmem [#allocation5], %s381
        %p383 = pneg %p91
        %p384 = pneg %p88
        %s385 = sand.u32 %s32, 1
        %s386 = scalar_lea.sflag [#allocation6], %s385
        %s387 = sand.u32 %s106, 1
        %s388 = smul.addr %s387, 256
        %s389 = scalar_lea.vmem [#allocation7], %s388
        %p390 = pneg %p119
        %p391 = pneg %p116
        %p392 = pneg %p140
        %p393 = pneg %p137
        %p394 = pneg %p161
        %p395 = pneg %p158
        %p396 = pneg %p189
        %p397 = pneg %p186
        %s398 = sand.u32 %s176, 1
        %s399 = scalar_lea.sflag [#allocation4], %s398
        %s400 = sand.u32 %s176, 1
        %s401 = smul.addr %s400, 256
        %s402 = scalar_lea.vmem [#allocation10], %s401
        %p403 = pneg %p217
        %p404 = pneg %p214
        %s405 = sand.u32 %s32, 1
        %s406 = scalar_lea.sflag [#allocation12], %s405
        %s407 = sand.u32 %s204, 1
        %s408 = smul.addr %s407, 256
        %s409 = scalar_lea.vmem [#allocation11], %s408
        %p410 = pneg %p245
        %p411 = pneg %p242
        %s412 = sand.u32 %s32, 1
        %s413 = scalar_lea.sflag [#allocation12], %s412
        %s414 = sand.u32 %s232, 1
        %s415 = smul.addr %s414, 256
        %s416 = scalar_lea.vmem [#allocation13], %s415
        %s417 = smul.u32 32, %s37
        %s418 = smul.u32 32, %s37
        %s419 = smul.u32 32, %s37
        %s420 = smul.u32 32, %s37
        %v421 = vld [vmem:[%s364] sm:$0xff]
        %v422 = vld [vmem:[%s364 + $0x8] sm:$0xff]
        %v423 = vld [vmem:[%s364 + $0x10] sm:$0xff]
        %v424 = vld [vmem:[%s364 + $0x18] sm:$0xff]
        %v425 = vld [vmem:[%s364 + $0x20] sm:$0xff]
        %v426 = vld [vmem:[%s364 + $0x28] sm:$0xff]
        %v427 = vld [vmem:[%s364 + $0x30] sm:$0xff]
        %v428 = vld [vmem:[%s364 + $0x38] sm:$0xff]
        %v429 = vld [vmem:[%s364 + $0x40] sm:$0xff]
        %v430 = vld [vmem:[%s364 + $0x48] sm:$0xff]
        %v431 = vld [vmem:[%s364 + $0x50] sm:$0xff]
        %v432 = vld [vmem:[%s364 + $0x58] sm:$0xff]
        %v433 = vld [vmem:[%s364 + $0x60] sm:$0xff]
        %v434 = vld [vmem:[%s364 + $0x68] sm:$0xff]
        %v435 = vld [vmem:[%s364 + $0x70] sm:$0xff]
        %v436 = vld [vmem:[%s364 + $0x78] sm:$0xff]
        %v437 = vld [vmem:[%s364 + $0x80] sm:$0xff]
        %v438 = vld [vmem:[%s364 + $0x88] sm:$0xff]
        %v439 = vld [vmem:[%s364 + $0x90] sm:$0xff]
        %v440 = vld [vmem:[%s364 + $0x98] sm:$0xff]
        %v441 = vld [vmem:[%s364 + $0xa0] sm:$0xff]
        %v442 = vld [vmem:[%s364 + $0xa8] sm:$0xff]
        %v443 = vld [vmem:[%s364 + $0xb0] sm:$0xff]
        %v444 = vld [vmem:[%s364 + $0xb8] sm:$0xff]
        %v445 = vld [vmem:[%s364 + $0xc0] sm:$0xff]
        %v446 = vld [vmem:[%s364 + $0xc8] sm:$0xff]
        %v447 = vld [vmem:[%s364 + $0xd0] sm:$0xff]
        %v448 = vld [vmem:[%s364 + $0xd8] sm:$0xff]
        %v449 = vld [vmem:[%s364 + $0xe0] sm:$0xff]
        %v450 = vld [vmem:[%s364 + $0xe8] sm:$0xff]
        %v451 = vld [vmem:[%s364 + $0xf0] sm:$0xff]
        %v452 = vld [vmem:[%s364 + $0xf8] sm:$0xff]
        %v453 = vld [vmem:[%s347] sm:$0x1]
        %v455 = vlaneseq
        %v456 = vshrl.u32 %v455, 7
        %v457 = vsub.s32 0, %v456
        %v458 = vrot.slane %v453, %v457
        %v460 = vmul.f32 %v421, %v458
        %v461 = vmul.f32 %v422, %v458
        %v462 = vmul.f32 %v423, %v458
        %v463 = vmul.f32 %v424, %v458
        %v464 = vmul.f32 %v425, %v458
        %v465 = vmul.f32 %v426, %v458
        %v466 = vmul.f32 %v427, %v458
        %v467 = vmul.f32 %v428, %v458
        %v468 = vmul.f32 %v429, %v458
        %v469 = vmul.f32 %v430, %v458
        %v470 = vmul.f32 %v431, %v458
        %v471 = vmul.f32 %v432, %v458
        %v472 = vmul.f32 %v433, %v458
        %v473 = vmul.f32 %v434, %v458
        %v474 = vmul.f32 %v435, %v458
        %v475 = vmul.f32 %v436, %v458
        %v476 = vmul.f32 %v437, %v458
        %v477 = vmul.f32 %v438, %v458
        %v478 = vmul.f32 %v439, %v458
        %v479 = vmul.f32 %v440, %v458
        %v480 = vmul.f32 %v441, %v458
        %v481 = vmul.f32 %v442, %v458
        %v482 = vmul.f32 %v443, %v458
        %v483 = vmul.f32 %v444, %v458
        %v484 = vmul.f32 %v445, %v458
        %v485 = vmul.f32 %v446, %v458
        %v486 = vmul.f32 %v447, %v458
        %v487 = vmul.f32 %v448, %v458
        %v488 = vmul.f32 %v449, %v458
        %v489 = vmul.f32 %v450, %v458
        %v490 = vmul.f32 %v451, %v458
        %v491 = vmul.f32 %v452, %v458
        %v492 = vld [vmem:[%s355] sm:$0x1]
        %v494 = vlaneseq
        %v495 = vshrl.u32 %v494, 7
        %v496 = vsub.s32 0, %v495
        %v497 = vrot.slane %v492, %v496
        %v499 = vadd.f32 %v460, %v497
        %v500 = vadd.f32 %v461, %v497
        %v501 = vadd.f32 %v462, %v497
        %v502 = vadd.f32 %v463, %v497
        %v503 = vadd.f32 %v464, %v497
        %v504 = vadd.f32 %v465, %v497
        %v505 = vadd.f32 %v466, %v497
        %v506 = vadd.f32 %v467, %v497
        %v507 = vadd.f32 %v468, %v497
        %v508 = vadd.f32 %v469, %v497
        %v509 = vadd.f32 %v470, %v497
        %v510 = vadd.f32 %v471, %v497
        %v511 = vadd.f32 %v472, %v497
        %v512 = vadd.f32 %v473, %v497
        %v513 = vadd.f32 %v474, %v497
        %v514 = vadd.f32 %v475, %v497
        %v515 = vadd.f32 %v476, %v497
        %v516 = vadd.f32 %v477, %v497
        %v517 = vadd.f32 %v478, %v497
        %v518 = vadd.f32 %v479, %v497
        %v519 = vadd.f32 %v480, %v497
        %v520 = vadd.f32 %v481, %v497
        %v521 = vadd.f32 %v482, %v497
        %v522 = vadd.f32 %v483, %v497
        %v523 = vadd.f32 %v484, %v497
        %v524 = vadd.f32 %v485, %v497
        %v525 = vadd.f32 %v486, %v497
        %v526 = vadd.f32 %v487, %v497
        %v527 = vadd.f32 %v488, %v497
        %v528 = vadd.f32 %v489, %v497
        %v529 = vadd.f32 %v490, %v497
        %v530 = vadd.f32 %v491, %v497
        %v531 = vld [vmem:[#allocation8] sm:$0xff]
        %v532 = vld [vmem:[#allocation8 + $0x8] sm:$0xff]
        %v533 = vld [vmem:[#allocation8 + $0x10] sm:$0xff]
        %v534 = vld [vmem:[#allocation8 + $0x18] sm:$0xff]
        %v535 = vld [vmem:[#allocation8 + $0x20] sm:$0xff]
        %v536 = vld [vmem:[#allocation8 + $0x28] sm:$0xff]
        %v537 = vld [vmem:[#allocation8 + $0x30] sm:$0xff]
        %v538 = vld [vmem:[#allocation8 + $0x38] sm:$0xff]
        %v539 = vld [vmem:[#allocation8 + $0x40] sm:$0xff]
        %v540 = vld [vmem:[#allocation8 + $0x48] sm:$0xff]
        %v541 = vld [vmem:[#allocation8 + $0x50] sm:$0xff]
        %v542 = vld [vmem:[#allocation8 + $0x58] sm:$0xff]
        %v543 = vld [vmem:[#allocation8 + $0x60] sm:$0xff]
        %v544 = vld [vmem:[#allocation8 + $0x68] sm:$0xff]
        %v545 = vld [vmem:[#allocation8 + $0x70] sm:$0xff]
        %v546 = vld [vmem:[#allocation8 + $0x78] sm:$0xff]
        %v547 = vld [vmem:[#allocation8 + $0x80] sm:$0xff]
        %v548 = vld [vmem:[#allocation8 + $0x88] sm:$0xff]
        %v549 = vld [vmem:[#allocation8 + $0x90] sm:$0xff]
        %v550 = vld [vmem:[#allocation8 + $0x98] sm:$0xff]
        %v551 = vld [vmem:[#allocation8 + $0xa0] sm:$0xff]
        %v552 = vld [vmem:[#allocation8 + $0xa8] sm:$0xff]
        %v553 = vld [vmem:[#allocation8 + $0xb0] sm:$0xff]
        %v554 = vld [vmem:[#allocation8 + $0xb8] sm:$0xff]
        %v555 = vld [vmem:[#allocation8 + $0xc0] sm:$0xff]
        %v556 = vld [vmem:[#allocation8 + $0xc8] sm:$0xff]
        %v557 = vld [vmem:[#allocation8 + $0xd0] sm:$0xff]
        %v558 = vld [vmem:[#allocation8 + $0xd8] sm:$0xff]
        %v559 = vld [vmem:[#allocation8 + $0xe0] sm:$0xff]
        %v560 = vld [vmem:[#allocation8 + $0xe8] sm:$0xff]
        %v561 = vld [vmem:[#allocation8 + $0xf0] sm:$0xff]
        %v562 = vld [vmem:[#allocation8 + $0xf8] sm:$0xff]
        %v563 = vld [vmem:[#allocation8 + $0x100] sm:$0xff]
        %v564 = vld [vmem:[#allocation8 + $0x108] sm:$0xff]
        %v565 = vld [vmem:[#allocation8 + $0x110] sm:$0xff]
        %v566 = vld [vmem:[#allocation8 + $0x118] sm:$0xff]
        %v567 = vld [vmem:[#allocation8 + $0x120] sm:$0xff]
        %v568 = vld [vmem:[#allocation8 + $0x128] sm:$0xff]
        %v569 = vld [vmem:[#allocation8 + $0x130] sm:$0xff]
        %v570 = vld [vmem:[#allocation8 + $0x138] sm:$0xff]
        %v571 = vld [vmem:[#allocation8 + $0x140] sm:$0xff]
        %v572 = vld [vmem:[#allocation8 + $0x148] sm:$0xff]
        %v573 = vld [vmem:[#allocation8 + $0x150] sm:$0xff]
        %v574 = vld [vmem:[#allocation8 + $0x158] sm:$0xff]
        %v575 = vld [vmem:[#allocation8 + $0x160] sm:$0xff]
        %v576 = vld [vmem:[#allocation8 + $0x168] sm:$0xff]
        %v577 = vld [vmem:[#allocation8 + $0x170] sm:$0xff]
        %v578 = vld [vmem:[#allocation8 + $0x178] sm:$0xff]
        %v579 = vld [vmem:[%s4] sm:$0x7]
        %v581 = vlaneseq
        %v582 = vshrl.u32 %v581, 7
        %v583 = vsub.s32 0, %v582
        %v584 = vrot.slane %v579, %v583
        %v585 = vlaneseq
        %v586 = vshrl.u32 %v585, 7
        %v587 = vsub.s32 1, %v586
        %v588 = vrot.slane %v579, %v587
        %v589 = vlaneseq
        %v590 = vshrl.u32 %v589, 7
        %v591 = vsub.s32 2, %v590
        %v592 = vrot.slane %v579, %v591
        %596 = vmatprep.subr.mxu0 %v577
        %597 = vmatpush1.msra.mxu0 %v576
        %598 = vmatprep.subr.mxu0 %v574
        %599 = vmatpush1.msra.mxu0 %v573
        %600 = vmatprep.subr.mxu0 %v571
        %601 = vmatpush1.msra.mxu0 %v570
        %602 = vmatprep.subr.mxu0 %v568
        %603 = vmatpush1.msra.mxu0 %v567
        %604 = vmatprep.subr.mxu0 %v565
        %605 = vmatpush1.msra.mxu0 %v564
        %606 = vmatprep.subr.mxu0 %v562
        %607 = vmatpush1.msra.mxu0 %v561
        %608 = vmatprep.subr.mxu0 %v559
        %609 = vmatpush1.msra.mxu0 %v558
        %610 = vmatprep.subr.mxu0 %v556
        %611 = vmatpush1.msra.mxu0 %v555
        %612 = vmatprep.subr.mxu0 %v553
        %613 = vmatpush1.msra.mxu0 %v552
        %614 = vmatprep.subr.mxu0 %v550
        %615 = vmatpush1.msra.mxu0 %v549
        %616 = vmatprep.subr.mxu0 %v547
        %617 = vmatpush1.msra.mxu0 %v546
        %618 = vmatprep.subr.mxu0 %v544
        %619 = vmatpush1.msra.mxu0 %v543
        %620 = vmatprep.subr.mxu0 %v541
        %621 = vmatpush1.msra.mxu0 %v540
        %622 = vmatprep.subr.mxu0 %v538
        %623 = vmatpush1.msra.mxu0 %v537
        %624 = vmatprep.subr.mxu0 %v535
        %625 = vmatpush1.msra.mxu0 %v534
        %626 = vmatprep.subr.mxu0 %v532
        %627 = vmatpush1.msra.mxu0 %v531
        %628 = vmatprep.subr.mxu0 0.0
        %629 = vmatpush2.msra.mxu0 0.0
        %630 = vmatprep.subr.mxu0 0.0
        %631 = vmatpush2.msra.mxu0 0.0
        %632 = vmatprep.subr.mxu0 0.0
        %633 = vmatpush2.msra.mxu0 0.0
        %634 = vmatprep.subr.mxu0 0.0
        %635 = vmatpush2.msra.mxu0 0.0
        %636 = vmatprep.subr.mxu0 0.0
        %637 = vmatpush2.msra.mxu0 0.0
        %638 = vmatprep.subr.mxu0 0.0
        %639 = vmatpush2.msra.mxu0 0.0
        %640 = vmatprep.subr.mxu0 0.0
        %641 = vmatpush2.msra.mxu0 0.0
        %642 = vmatprep.subr.mxu0 0.0
        %643 = vmatpush2.msra.mxu0 0.0
        %644 = vmatprep.subr.mxu0 0.0
        %645 = vmatpush2.msra.mxu0 0.0
        %646 = vmatprep.subr.mxu0 0.0
        %647 = vmatpush2.msra.mxu0 0.0
        %648 = vmatprep.subr.mxu0 0.0
        %649 = vmatpush2.msra.mxu0 0.0
        %650 = vmatprep.subr.mxu0 0.0
        %651 = vmatpush2.msra.mxu0 0.0
        %652 = vmatprep.subr.mxu0 0.0
        %653 = vmatpush2.msra.mxu0 0.0
        %654 = vmatprep.subr.mxu0 0.0
        %655 = vmatpush2.msra.mxu0 0.0
        %656 = vmatprep.subr.mxu0 0.0
        %657 = vmatpush2.msra.mxu0 0.0
        %658 = vmatprep.subr.mxu0 0.0
        %659 = vmatpush2.msra.mxu0 0.0
        %660 = vmatprep.mubr.f32.mxu0 0.0
        %661 = vmatmul.mubr.f32.gmra.mxu0 %v499
        %v662 = vpop.f32.mrf.mxu0
        %v663 = vadd.f32 %v584, %v662
        %v664 = vpop.f32.mrf.mxu0
        %v665 = vadd.f32 %v588, %v664
        %666 = vmatprep.mubr.f32.mxu0 0.0
        %667 = vmatmul.mubr.f32.gmra.mxu0 %v500
        %v668 = vpop.f32.mrf.mxu0
        %v669 = vadd.f32 %v584, %v668
        %v670 = vpop.f32.mrf.mxu0
        %v671 = vadd.f32 %v588, %v670
        %672 = vmatprep.mubr.f32.mxu0 0.0
        %673 = vmatmul.mubr.f32.gmra.mxu0 %v501
        %v674 = vpop.f32.mrf.mxu0
        %v675 = vadd.f32 %v584, %v674
        %v676 = vpop.f32.mrf.mxu0
        %v677 = vadd.f32 %v588, %v676
        %678 = vmatprep.mubr.f32.mxu0 0.0
        %679 = vmatmul.mubr.f32.gmra.mxu0 %v502
        %v680 = vpop.f32.mrf.mxu0
        %v681 = vadd.f32 %v584, %v680
        %v682 = vpop.f32.mrf.mxu0
        %v683 = vadd.f32 %v588, %v682
        %684 = vmatprep.mubr.f32.mxu0 0.0
        %685 = vmatmul.mubr.f32.gmra.mxu0 %v503
        %v686 = vpop.f32.mrf.mxu0
        %v687 = vadd.f32 %v584, %v686
        %v688 = vpop.f32.mrf.mxu0
        %v689 = vadd.f32 %v588, %v688
        %690 = vmatprep.mubr.f32.mxu0 0.0
        %691 = vmatmul.mubr.f32.gmra.mxu0 %v504
        %v692 = vpop.f32.mrf.mxu0
        %v693 = vadd.f32 %v584, %v692
        %v694 = vpop.f32.mrf.mxu0
        %v695 = vadd.f32 %v588, %v694
        %696 = vmatprep.mubr.f32.mxu0 0.0
        %697 = vmatmul.mubr.f32.gmra.mxu0 %v505
        %v698 = vpop.f32.mrf.mxu0
        %v699 = vadd.f32 %v584, %v698
        %v700 = vpop.f32.mrf.mxu0
        %v701 = vadd.f32 %v588, %v700
        %702 = vmatprep.mubr.f32.mxu0 0.0
        %703 = vmatmul.mubr.f32.gmra.mxu0 %v506
        %v704 = vpop.f32.mrf.mxu0
        %v705 = vadd.f32 %v584, %v704
        %v706 = vpop.f32.mrf.mxu0
        %v707 = vadd.f32 %v588, %v706
        %708 = vmatprep.mubr.f32.mxu0 0.0
        %709 = vmatmul.mubr.f32.gmra.mxu0 %v507
        %v710 = vpop.f32.mrf.mxu0
        %v711 = vadd.f32 %v584, %v710
        %v712 = vpop.f32.mrf.mxu0
        %v713 = vadd.f32 %v588, %v712
        %714 = vmatprep.mubr.f32.mxu0 0.0
        %715 = vmatmul.mubr.f32.gmra.mxu0 %v508
        %v716 = vpop.f32.mrf.mxu0
        %v717 = vadd.f32 %v584, %v716
        %v718 = vpop.f32.mrf.mxu0
        %v719 = vadd.f32 %v588, %v718
        %720 = vmatprep.mubr.f32.mxu0 0.0
        %721 = vmatmul.mubr.f32.gmra.mxu0 %v509
        %v722 = vpop.f32.mrf.mxu0
        %v723 = vadd.f32 %v584, %v722
        %v724 = vpop.f32.mrf.mxu0
        %v725 = vadd.f32 %v588, %v724
        %726 = vmatprep.mubr.f32.mxu0 0.0
        %727 = vmatmul.mubr.f32.gmra.mxu0 %v510
        %v728 = vpop.f32.mrf.mxu0
        %v729 = vadd.f32 %v584, %v728
        %v730 = vpop.f32.mrf.mxu0
        %v731 = vadd.f32 %v588, %v730
        %732 = vmatprep.mubr.f32.mxu0 0.0
        %733 = vmatmul.mubr.f32.gmra.mxu0 %v511
        %v734 = vpop.f32.mrf.mxu0
        %v735 = vadd.f32 %v584, %v734
        %v736 = vpop.f32.mrf.mxu0
        %v737 = vadd.f32 %v588, %v736
        %738 = vmatprep.mubr.f32.mxu0 0.0
        %739 = vmatmul.mubr.f32.gmra.mxu0 %v512
        %v740 = vpop.f32.mrf.mxu0
        %v741 = vadd.f32 %v584, %v740
        %v742 = vpop.f32.mrf.mxu0
        %v743 = vadd.f32 %v588, %v742
        %744 = vmatprep.mubr.f32.mxu0 0.0
        %745 = vmatmul.mubr.f32.gmra.mxu0 %v513
        %v746 = vpop.f32.mrf.mxu0
        %v747 = vadd.f32 %v584, %v746
        %v748 = vpop.f32.mrf.mxu0
        %v749 = vadd.f32 %v588, %v748
        %750 = vmatprep.mubr.f32.mxu0 0.0
        %751 = vmatmul.mubr.f32.gmra.mxu0 %v514
        %v752 = vpop.f32.mrf.mxu0
        %v753 = vadd.f32 %v584, %v752
        %v754 = vpop.f32.mrf.mxu0
        %v755 = vadd.f32 %v588, %v754
        %756 = vmatprep.mubr.f32.mxu0 0.0
        %757 = vmatmul.mubr.f32.gmra.mxu0 %v515
        %v758 = vpop.f32.mrf.mxu0
        %v759 = vadd.f32 %v584, %v758
        %v760 = vpop.f32.mrf.mxu0
        %v761 = vadd.f32 %v588, %v760
        %762 = vmatprep.mubr.f32.mxu0 0.0
        %763 = vmatmul.mubr.f32.gmra.mxu0 %v516
        %v764 = vpop.f32.mrf.mxu0
        %v765 = vadd.f32 %v584, %v764
        %v766 = vpop.f32.mrf.mxu0
        %v767 = vadd.f32 %v588, %v766
        %768 = vmatprep.mubr.f32.mxu0 0.0
        %769 = vmatmul.mubr.f32.gmra.mxu0 %v517
        %v770 = vpop.f32.mrf.mxu0
        %v771 = vadd.f32 %v584, %v770
        %v772 = vpop.f32.mrf.mxu0
        %v773 = vadd.f32 %v588, %v772
        %774 = vmatprep.mubr.f32.mxu0 0.0
        %775 = vmatmul.mubr.f32.gmra.mxu0 %v518
        %v776 = vpop.f32.mrf.mxu0
        %v777 = vadd.f32 %v584, %v776
        %v778 = vpop.f32.mrf.mxu0
        %v779 = vadd.f32 %v588, %v778
        %780 = vmatprep.mubr.f32.mxu0 0.0
        %781 = vmatmul.mubr.f32.gmra.mxu0 %v519
        %v782 = vpop.f32.mrf.mxu0
        %v783 = vadd.f32 %v584, %v782
        %v784 = vpop.f32.mrf.mxu0
        %v785 = vadd.f32 %v588, %v784
        %786 = vmatprep.mubr.f32.mxu0 0.0
        %787 = vmatmul.mubr.f32.gmra.mxu0 %v520
        %v788 = vpop.f32.mrf.mxu0
        %v789 = vadd.f32 %v584, %v788
        %v790 = vpop.f32.mrf.mxu0
        %v791 = vadd.f32 %v588, %v790
        %792 = vmatprep.mubr.f32.mxu0 0.0
        %793 = vmatmul.mubr.f32.gmra.mxu0 %v521
        %v794 = vpop.f32.mrf.mxu0
        %v795 = vadd.f32 %v584, %v794
        %v796 = vpop.f32.mrf.mxu0
        %v797 = vadd.f32 %v588, %v796
        %798 = vmatprep.mubr.f32.mxu0 0.0
        %799 = vmatmul.mubr.f32.gmra.mxu0 %v522
        %v800 = vpop.f32.mrf.mxu0
        %v801 = vadd.f32 %v584, %v800
        %v802 = vpop.f32.mrf.mxu0
        %v803 = vadd.f32 %v588, %v802
        %804 = vmatprep.mubr.f32.mxu0 0.0
        %805 = vmatmul.mubr.f32.gmra.mxu0 %v523
        %v806 = vpop.f32.mrf.mxu0
        %v807 = vadd.f32 %v584, %v806
        %v808 = vpop.f32.mrf.mxu0
        %v809 = vadd.f32 %v588, %v808
        %810 = vmatprep.mubr.f32.mxu0 0.0
        %811 = vmatmul.mubr.f32.gmra.mxu0 %v524
        %v812 = vpop.f32.mrf.mxu0
        %v813 = vadd.f32 %v584, %v812
        %v814 = vpop.f32.mrf.mxu0
        %v815 = vadd.f32 %v588, %v814
        %816 = vmatprep.mubr.f32.mxu0 0.0
        %817 = vmatmul.mubr.f32.gmra.mxu0 %v525
        %v818 = vpop.f32.mrf.mxu0
        %v819 = vadd.f32 %v584, %v818
        %v820 = vpop.f32.mrf.mxu0
        %v821 = vadd.f32 %v588, %v820
        %822 = vmatprep.mubr.f32.mxu0 0.0
        %823 = vmatmul.mubr.f32.gmra.mxu0 %v526
        %v824 = vpop.f32.mrf.mxu0
        %v825 = vadd.f32 %v584, %v824
        %v826 = vpop.f32.mrf.mxu0
        %v827 = vadd.f32 %v588, %v826
        %828 = vmatprep.mubr.f32.mxu0 0.0
        %829 = vmatmul.mubr.f32.gmra.mxu0 %v527
        %v830 = vpop.f32.mrf.mxu0
        %v831 = vadd.f32 %v584, %v830
        %v832 = vpop.f32.mrf.mxu0
        %v833 = vadd.f32 %v588, %v832
        %834 = vmatprep.mubr.f32.mxu0 0.0
        %835 = vmatmul.mubr.f32.gmra.mxu0 %v528
        %v836 = vpop.f32.mrf.mxu0
        %v837 = vadd.f32 %v584, %v836
        %v838 = vpop.f32.mrf.mxu0
        %v839 = vadd.f32 %v588, %v838
        %840 = vmatprep.mubr.f32.mxu0 0.0
        %841 = vmatmul.mubr.f32.gmra.mxu0 %v529
        %v842 = vpop.f32.mrf.mxu0
        %v843 = vadd.f32 %v584, %v842
        %v844 = vpop.f32.mrf.mxu0
        %v845 = vadd.f32 %v588, %v844
        %846 = vmatprep.mubr.f32.mxu0 0.0
        %847 = vmatmul.mubr.f32.gmra.mxu0 %v530
        %v848 = vpop.f32.mrf.mxu0
        %v849 = vadd.f32 %v584, %v848
        %v850 = vpop.f32.mrf.mxu0
        %v851 = vadd.f32 %v588, %v850
        %852 = vdwg.mxu0
        %853 = vmatprep.subr.mxu0 0.0
        %854 = vmatpush1.msra.mxu0 %v578
        %855 = vmatprep.subr.mxu0 0.0
        %856 = vmatpush1.msra.mxu0 %v575
        %857 = vmatprep.subr.mxu0 0.0
        %858 = vmatpush1.msra.mxu0 %v572
        %859 = vmatprep.subr.mxu0 0.0
        %860 = vmatpush1.msra.mxu0 %v569
        %861 = vmatprep.subr.mxu0 0.0
        %862 = vmatpush1.msra.mxu0 %v566
        %863 = vmatprep.subr.mxu0 0.0
        %864 = vmatpush1.msra.mxu0 %v563
        %865 = vmatprep.subr.mxu0 0.0
        %866 = vmatpush1.msra.mxu0 %v560
        %867 = vmatprep.subr.mxu0 0.0
        %868 = vmatpush1.msra.mxu0 %v557
        %869 = vmatprep.subr.mxu0 0.0
        %870 = vmatpush1.msra.mxu0 %v554
        %871 = vmatprep.subr.mxu0 0.0
        %872 = vmatpush1.msra.mxu0 %v551
        %873 = vmatprep.subr.mxu0 0.0
        %874 = vmatpush1.msra.mxu0 %v548
        %875 = vmatprep.subr.mxu0 0.0
        %876 = vmatpush1.msra.mxu0 %v545
        %877 = vmatprep.subr.mxu0 0.0
        %878 = vmatpush1.msra.mxu0 %v542
        %879 = vmatprep.subr.mxu0 0.0
        %880 = vmatpush1.msra.mxu0 %v539
        %881 = vmatprep.subr.mxu0 0.0
        %882 = vmatpush1.msra.mxu0 %v536
        %883 = vmatprep.subr.mxu0 0.0
        %884 = vmatpush1.msra.mxu0 %v533
        %885 = vmatprep.subr.mxu0 0.0
        %886 = vmatpush2.msra.mxu0 0.0
        %887 = vmatprep.subr.mxu0 0.0
        %888 = vmatpush2.msra.mxu0 0.0
        %889 = vmatprep.subr.mxu0 0.0
        %890 = vmatpush2.msra.mxu0 0.0
        %891 = vmatprep.subr.mxu0 0.0
        %892 = vmatpush2.msra.mxu0 0.0
        %893 = vmatprep.subr.mxu0 0.0
        %894 = vmatpush2.msra.mxu0 0.0
        %895 = vmatprep.subr.mxu0 0.0
        %896 = vmatpush2.msra.mxu0 0.0
        %897 = vmatprep.subr.mxu0 0.0
        %898 = vmatpush2.msra.mxu0 0.0
        %899 = vmatprep.subr.mxu0 0.0
        %900 = vmatpush2.msra.mxu0 0.0
        %901 = vmatprep.subr.mxu0 0.0
        %902 = vmatpush2.msra.mxu0 0.0
        %903 = vmatprep.subr.mxu0 0.0
        %904 = vmatpush2.msra.mxu0 0.0
        %905 = vmatprep.subr.mxu0 0.0
        %906 = vmatpush2.msra.mxu0 0.0
        %907 = vmatprep.subr.mxu0 0.0
        %908 = vmatpush2.msra.mxu0 0.0
        %909 = vmatprep.subr.mxu0 0.0
        %910 = vmatpush2.msra.mxu0 0.0
        %911 = vmatprep.subr.mxu0 0.0
        %912 = vmatpush2.msra.mxu0 0.0
        %913 = vmatprep.subr.mxu0 0.0
        %914 = vmatpush2.msra.mxu0 0.0
        %915 = vmatprep.subr.mxu0 0.0
        %916 = vmatpush2.msra.mxu0 0.0
        %917 = vmatprep.mubr.f32.mxu0 0.0
        %918 = vmatmul.mubr.f32.gmra.mxu0 %v499
        %v919 = vpop.f32.mrf.mxu0
        %v920 = vadd.f32 %v592, %v919
        %v921 = vpop.f32.mrf.mxu0
        %922 = vmatprep.mubr.f32.mxu0 0.0
        %923 = vmatmul.mubr.f32.gmra.mxu0 %v500
        %v924 = vpop.f32.mrf.mxu0
        %v925 = vadd.f32 %v592, %v924
        %v926 = vpop.f32.mrf.mxu0
        %927 = vmatprep.mubr.f32.mxu0 0.0
        %928 = vmatmul.mubr.f32.gmra.mxu0 %v501
        %v929 = vpop.f32.mrf.mxu0
        %v930 = vadd.f32 %v592, %v929
        %v931 = vpop.f32.mrf.mxu0
        %932 = vmatprep.mubr.f32.mxu0 0.0
        %933 = vmatmul.mubr.f32.gmra.mxu0 %v502
        %v934 = vpop.f32.mrf.mxu0
        %v935 = vadd.f32 %v592, %v934
        %v936 = vpop.f32.mrf.mxu0
        %937 = vmatprep.mubr.f32.mxu0 0.0
        %938 = vmatmul.mubr.f32.gmra.mxu0 %v503
        %v939 = vpop.f32.mrf.mxu0
        %v940 = vadd.f32 %v592, %v939
        %v941 = vpop.f32.mrf.mxu0
        %942 = vmatprep.mubr.f32.mxu0 0.0
        %943 = vmatmul.mubr.f32.gmra.mxu0 %v504
        %v944 = vpop.f32.mrf.mxu0
        %v945 = vadd.f32 %v592, %v944
        %v946 = vpop.f32.mrf.mxu0
        %947 = vmatprep.mubr.f32.mxu0 0.0
        %948 = vmatmul.mubr.f32.gmra.mxu0 %v505
        %v949 = vpop.f32.mrf.mxu0
        %v950 = vadd.f32 %v592, %v949
        %v951 = vpop.f32.mrf.mxu0
        %952 = vmatprep.mubr.f32.mxu0 0.0
        %953 = vmatmul.mubr.f32.gmra.mxu0 %v506
        %v954 = vpop.f32.mrf.mxu0
        %v955 = vadd.f32 %v592, %v954
        %v956 = vpop.f32.mrf.mxu0
        %957 = vmatprep.mubr.f32.mxu0 0.0
        %958 = vmatmul.mubr.f32.gmra.mxu0 %v507
        %v959 = vpop.f32.mrf.mxu0
        %v960 = vadd.f32 %v592, %v959
        %v961 = vpop.f32.mrf.mxu0
        %962 = vmatprep.mubr.f32.mxu0 0.0
        %963 = vmatmul.mubr.f32.gmra.mxu0 %v508
        %v964 = vpop.f32.mrf.mxu0
        %v965 = vadd.f32 %v592, %v964
        %v966 = vpop.f32.mrf.mxu0
        %967 = vmatprep.mubr.f32.mxu0 0.0
        %968 = vmatmul.mubr.f32.gmra.mxu0 %v509
        %v969 = vpop.f32.mrf.mxu0
        %v970 = vadd.f32 %v592, %v969
        %v971 = vpop.f32.mrf.mxu0
        %972 = vmatprep.mubr.f32.mxu0 0.0
        %973 = vmatmul.mubr.f32.gmra.mxu0 %v510
        %v974 = vpop.f32.mrf.mxu0
        %v975 = vadd.f32 %v592, %v974
        %v976 = vpop.f32.mrf.mxu0
        %977 = vmatprep.mubr.f32.mxu0 0.0
        %978 = vmatmul.mubr.f32.gmra.mxu0 %v511
        %v979 = vpop.f32.mrf.mxu0
        %v980 = vadd.f32 %v592, %v979
        %v981 = vpop.f32.mrf.mxu0
        %982 = vmatprep.mubr.f32.mxu0 0.0
        %983 = vmatmul.mubr.f32.gmra.mxu0 %v512
        %v984 = vpop.f32.mrf.mxu0
        %v985 = vadd.f32 %v592, %v984
        %v986 = vpop.f32.mrf.mxu0
        %987 = vmatprep.mubr.f32.mxu0 0.0
        %988 = vmatmul.mubr.f32.gmra.mxu0 %v513
        %v989 = vpop.f32.mrf.mxu0
        %v990 = vadd.f32 %v592, %v989
        %v991 = vpop.f32.mrf.mxu0
        %992 = vmatprep.mubr.f32.mxu0 0.0
        %993 = vmatmul.mubr.f32.gmra.mxu0 %v514
        %v994 = vpop.f32.mrf.mxu0
        %v995 = vadd.f32 %v592, %v994
        %v996 = vpop.f32.mrf.mxu0
        %997 = vmatprep.mubr.f32.mxu0 0.0
        %998 = vmatmul.mubr.f32.gmra.mxu0 %v515
        %v999 = vpop.f32.mrf.mxu0
        %v1000 = vadd.f32 %v592, %v999
        %v1001 = vpop.f32.mrf.mxu0
        %1002 = vmatprep.mubr.f32.mxu0 0.0
        %1003 = vmatmul.mubr.f32.gmra.mxu0 %v516
        %v1004 = vpop.f32.mrf.mxu0
        %v1005 = vadd.f32 %v592, %v1004
        %v1006 = vpop.f32.mrf.mxu0
        %1007 = vmatprep.mubr.f32.mxu0 0.0
        %1008 = vmatmul.mubr.f32.gmra.mxu0 %v517
        %v1009 = vpop.f32.mrf.mxu0
        %v1010 = vadd.f32 %v592, %v1009
        %v1011 = vpop.f32.mrf.mxu0
        %1012 = vmatprep.mubr.f32.mxu0 0.0
        %1013 = vmatmul.mubr.f32.gmra.mxu0 %v518
        %v1014 = vpop.f32.mrf.mxu0
        %v1015 = vadd.f32 %v592, %v1014
        %v1016 = vpop.f32.mrf.mxu0
        %1017 = vmatprep.mubr.f32.mxu0 0.0
        %1018 = vmatmul.mubr.f32.gmra.mxu0 %v519
        %v1019 = vpop.f32.mrf.mxu0
        %v1020 = vadd.f32 %v592, %v1019
        %v1021 = vpop.f32.mrf.mxu0
        %1022 = vmatprep.mubr.f32.mxu0 0.0
        %1023 = vmatmul.mubr.f32.gmra.mxu0 %v520
        %v1024 = vpop.f32.mrf.mxu0
        %v1025 = vadd.f32 %v592, %v1024
        %v1026 = vpop.f32.mrf.mxu0
        %1027 = vmatprep.mubr.f32.mxu0 0.0
        %1028 = vmatmul.mubr.f32.gmra.mxu0 %v521
        %v1029 = vpop.f32.mrf.mxu0
        %v1030 = vadd.f32 %v592, %v1029
        %v1031 = vpop.f32.mrf.mxu0
        %1032 = vmatprep.mubr.f32.mxu0 0.0
        %1033 = vmatmul.mubr.f32.gmra.mxu0 %v522
        %v1034 = vpop.f32.mrf.mxu0
        %v1035 = vadd.f32 %v592, %v1034
        %v1036 = vpop.f32.mrf.mxu0
        %1037 = vmatprep.mubr.f32.mxu0 0.0
        %1038 = vmatmul.mubr.f32.gmra.mxu0 %v523
        %v1039 = vpop.f32.mrf.mxu0
        %v1040 = vadd.f32 %v592, %v1039
        %v1041 = vpop.f32.mrf.mxu0
        %1042 = vmatprep.mubr.f32.mxu0 0.0
        %1043 = vmatmul.mubr.f32.gmra.mxu0 %v524
        %v1044 = vpop.f32.mrf.mxu0
        %v1045 = vadd.f32 %v592, %v1044
        %v1046 = vpop.f32.mrf.mxu0
        %1047 = vmatprep.mubr.f32.mxu0 0.0
        %1048 = vmatmul.mubr.f32.gmra.mxu0 %v525
        %v1049 = vpop.f32.mrf.mxu0
        %v1050 = vadd.f32 %v592, %v1049
        %v1051 = vpop.f32.mrf.mxu0
        %1052 = vmatprep.mubr.f32.mxu0 0.0
        %1053 = vmatmul.mubr.f32.gmra.mxu0 %v526
        %v1054 = vpop.f32.mrf.mxu0
        %v1055 = vadd.f32 %v592, %v1054
        %v1056 = vpop.f32.mrf.mxu0
        %1057 = vmatprep.mubr.f32.mxu0 0.0
        %1058 = vmatmul.mubr.f32.gmra.mxu0 %v527
        %v1059 = vpop.f32.mrf.mxu0
        %v1060 = vadd.f32 %v592, %v1059
        %v1061 = vpop.f32.mrf.mxu0
        %1062 = vmatprep.mubr.f32.mxu0 0.0
        %1063 = vmatmul.mubr.f32.gmra.mxu0 %v528
        %v1064 = vpop.f32.mrf.mxu0
        %v1065 = vadd.f32 %v592, %v1064
        %v1066 = vpop.f32.mrf.mxu0
        %1067 = vmatprep.mubr.f32.mxu0 0.0
        %1068 = vmatmul.mubr.f32.gmra.mxu0 %v529
        %v1069 = vpop.f32.mrf.mxu0
        %v1070 = vadd.f32 %v592, %v1069
        %v1071 = vpop.f32.mrf.mxu0
        %1072 = vmatprep.mubr.f32.mxu0 0.0
        %1073 = vmatmul.mubr.f32.gmra.mxu0 %v530
        %v1074 = vpop.f32.mrf.mxu0
        %v1075 = vadd.f32 %v592, %v1074
        %v1076 = vpop.f32.mrf.mxu0
        %1077 = vdwg.mxu0
        %1078 = vst [vmem:[%s402] sm:$0xff] %v663
        %1079 = vst [vmem:[%s402 + $0x8] sm:$0xff] %v669
        %1080 = vst [vmem:[%s402 + $0x10] sm:$0xff] %v675
        %1081 = vst [vmem:[%s402 + $0x18] sm:$0xff] %v681
        %1082 = vst [vmem:[%s402 + $0x20] sm:$0xff] %v687
        %1083 = vst [vmem:[%s402 + $0x28] sm:$0xff] %v693
        %1084 = vst [vmem:[%s402 + $0x30] sm:$0xff] %v699
        %1085 = vst [vmem:[%s402 + $0x38] sm:$0xff] %v705
        %1086 = vst [vmem:[%s402 + $0x40] sm:$0xff] %v711
        %1087 = vst [vmem:[%s402 + $0x48] sm:$0xff] %v717
        %1088 = vst [vmem:[%s402 + $0x50] sm:$0xff] %v723
        %1089 = vst [vmem:[%s402 + $0x58] sm:$0xff] %v729
        %1090 = vst [vmem:[%s402 + $0x60] sm:$0xff] %v735
        %1091 = vst [vmem:[%s402 + $0x68] sm:$0xff] %v741
        %1092 = vst [vmem:[%s402 + $0x70] sm:$0xff] %v747
        %1093 = vst [vmem:[%s402 + $0x78] sm:$0xff] %v753
        %1094 = vst [vmem:[%s402 + $0x80] sm:$0xff] %v759
        %1095 = vst [vmem:[%s402 + $0x88] sm:$0xff] %v765
        %1096 = vst [vmem:[%s402 + $0x90] sm:$0xff] %v771
        %1097 = vst [vmem:[%s402 + $0x98] sm:$0xff] %v777
        %1098 = vst [vmem:[%s402 + $0xa0] sm:$0xff] %v783
        %1099 = vst [vmem:[%s402 + $0xa8] sm:$0xff] %v789
        %1100 = vst [vmem:[%s402 + $0xb0] sm:$0xff] %v795
        %1101 = vst [vmem:[%s402 + $0xb8] sm:$0xff] %v801
        %1102 = vst [vmem:[%s402 + $0xc0] sm:$0xff] %v807
        %1103 = vst [vmem:[%s402 + $0xc8] sm:$0xff] %v813
        %1104 = vst [vmem:[%s402 + $0xd0] sm:$0xff] %v819
        %1105 = vst [vmem:[%s402 + $0xd8] sm:$0xff] %v825
        %1106 = vst [vmem:[%s402 + $0xe0] sm:$0xff] %v831
        %1107 = vst [vmem:[%s402 + $0xe8] sm:$0xff] %v837
        %1108 = vst [vmem:[%s402 + $0xf0] sm:$0xff] %v843
        %1109 = vst [vmem:[%s402 + $0xf8] sm:$0xff] %v849
        %1110 = vst [vmem:[%s409] sm:$0xff] %v665
        %1111 = vst [vmem:[%s409 + $0x8] sm:$0xff] %v671
        %1112 = vst [vmem:[%s409 + $0x10] sm:$0xff] %v677
        %1113 = vst [vmem:[%s409 + $0x18] sm:$0xff] %v683
        %1114 = vst [vmem:[%s409 + $0x20] sm:$0xff] %v689
        %1115 = vst [vmem:[%s409 + $0x28] sm:$0xff] %v695
        %1116 = vst [vmem:[%s409 + $0x30] sm:$0xff] %v701
        %1117 = vst [vmem:[%s409 + $0x38] sm:$0xff] %v707
        %1118 = vst [vmem:[%s409 + $0x40] sm:$0xff] %v713
        %1119 = vst [vmem:[%s409 + $0x48] sm:$0xff] %v719
        %1120 = vst [vmem:[%s409 + $0x50] sm:$0xff] %v725
        %1121 = vst [vmem:[%s409 + $0x58] sm:$0xff] %v731
        %1122 = vst [vmem:[%s409 + $0x60] sm:$0xff] %v737
        %1123 = vst [vmem:[%s409 + $0x68] sm:$0xff] %v743
        %1124 = vst [vmem:[%s409 + $0x70] sm:$0xff] %v749
        %1125 = vst [vmem:[%s409 + $0x78] sm:$0xff] %v755
        %1126 = vst [vmem:[%s409 + $0x80] sm:$0xff] %v761
        %1127 = vst [vmem:[%s409 + $0x88] sm:$0xff] %v767
        %1128 = vst [vmem:[%s409 + $0x90] sm:$0xff] %v773
        %1129 = vst [vmem:[%s409 + $0x98] sm:$0xff] %v779
        %1130 = vst [vmem:[%s409 + $0xa0] sm:$0xff] %v785
        %1131 = vst [vmem:[%s409 + $0xa8] sm:$0xff] %v791
        %1132 = vst [vmem:[%s409 + $0xb0] sm:$0xff] %v797
        %1133 = vst [vmem:[%s409 + $0xb8] sm:$0xff] %v803
        %1134 = vst [vmem:[%s409 + $0xc0] sm:$0xff] %v809
        %1135 = vst [vmem:[%s409 + $0xc8] sm:$0xff] %v815
        %1136 = vst [vmem:[%s409 + $0xd0] sm:$0xff] %v821
        %1137 = vst [vmem:[%s409 + $0xd8] sm:$0xff] %v827
        %1138 = vst [vmem:[%s409 + $0xe0] sm:$0xff] %v833
        %1139 = vst [vmem:[%s409 + $0xe8] sm:$0xff] %v839
        %1140 = vst [vmem:[%s409 + $0xf0] sm:$0xff] %v845
        %1141 = vst [vmem:[%s409 + $0xf8] sm:$0xff] %v851
        %1142 = vst [vmem:[%s416] sm:$0xff] %v920
        %1143 = vst [vmem:[%s416 + $0x8] sm:$0xff] %v925
        %1144 = vst [vmem:[%s416 + $0x10] sm:$0xff] %v930
        %1145 = vst [vmem:[%s416 + $0x18] sm:$0xff] %v935
        %1146 = vst [vmem:[%s416 + $0x20] sm:$0xff] %v940
        %1147 = vst [vmem:[%s416 + $0x28] sm:$0xff] %v945
        %1148 = vst [vmem:[%s416 + $0x30] sm:$0xff] %v950
        %1149 = vst [vmem:[%s416 + $0x38] sm:$0xff] %v955
        %1150 = vst [vmem:[%s416 + $0x40] sm:$0xff] %v960
        %1151 = vst [vmem:[%s416 + $0x48] sm:$0xff] %v965
        %1152 = vst [vmem:[%s416 + $0x50] sm:$0xff] %v970
        %1153 = vst [vmem:[%s416 + $0x58] sm:$0xff] %v975
        %1154 = vst [vmem:[%s416 + $0x60] sm:$0xff] %v980
        %1155 = vst [vmem:[%s416 + $0x68] sm:$0xff] %v985
        %1156 = vst [vmem:[%s416 + $0x70] sm:$0xff] %v990
        %1157 = vst [vmem:[%s416 + $0x78] sm:$0xff] %v995
        %1158 = vst [vmem:[%s416 + $0x80] sm:$0xff] %v1000
        %1159 = vst [vmem:[%s416 + $0x88] sm:$0xff] %v1005
        %1160 = vst [vmem:[%s416 + $0x90] sm:$0xff] %v1010
        %1161 = vst [vmem:[%s416 + $0x98] sm:$0xff] %v1015
        %1162 = vst [vmem:[%s416 + $0xa0] sm:$0xff] %v1020
        %1163 = vst [vmem:[%s416 + $0xa8] sm:$0xff] %v1025
        %1164 = vst [vmem:[%s416 + $0xb0] sm:$0xff] %v1030
        %1165 = vst [vmem:[%s416 + $0xb8] sm:$0xff] %v1035
        %1166 = vst [vmem:[%s416 + $0xc0] sm:$0xff] %v1040
        %1167 = vst [vmem:[%s416 + $0xc8] sm:$0xff] %v1045
        %1168 = vst [vmem:[%s416 + $0xd0] sm:$0xff] %v1050
        %1169 = vst [vmem:[%s416 + $0xd8] sm:$0xff] %v1055
        %1170 = vst [vmem:[%s416 + $0xe0] sm:$0xff] %v1060
        %1171 = vst [vmem:[%s416 + $0xe8] sm:$0xff] %v1065
        %1172 = vst [vmem:[%s416 + $0xf0] sm:$0xff] %v1070
        %1173 = vst [vmem:[%s416 + $0xf8] sm:$0xff] %v1075
        %s1174 = sand.u32 %s176, 1
        %s1175 = scalar_lea.sflag [#allocation4], %s1174
        %s1176 = sand.u32 %s176, 1
        %s1177 = smul.addr %s1176, 256
        %s1178 = scalar_lea.vmem [#allocation10], %s1177
        %s1179 = sand.u32 %s32, 1
        %s1180 = scalar_lea.sflag [#allocation12], %s1179
        %s1181 = sand.u32 %s204, 1
        %s1182 = smul.addr %s1181, 256
        %s1183 = scalar_lea.vmem [#allocation11], %s1182
        %s1184 = sand.u32 %s32, 1
        %s1185 = scalar_lea.sflag [#allocation12], %s1184
        %s1186 = sand.u32 %s232, 1
        %s1187 = smul.addr %s1186, 256
        %s1188 = scalar_lea.vmem [#allocation13], %s1187
        // Predicated region
        $region57: #{tpu_custom_call.1} parent=39 // pred_check
          %p1189 = pneg %p186
        $region58: #{tpu_custom_call.1} parent=39 // pred_check_branch
          %1191 = sbr.rel (%p1189) target = $region60
        $region59: #{tpu_custom_call.1} parent=39 // pred_region
          %s1192 = smul.u32 32, %s37
          %s1194 = ssub.s32 4096, 4096
          %1195 = vsyncadd %s1175, %s1194
          %s1196 = smul.addr %s36, 32
          %s1197 = sadd.s32 %s1192, %s1196
          %s1198 = smul.addr %s1197, 128
          %s1199 = scalar_lea.hbm %s5, %s1198
          %s1200 = sshll.u32 %s1178, 4
          %s1201 = int_to_ptr.vmem [resolvable:$true] %s1200
          %1206 = dma.vmem_to_hbm [thread:$0]  %s1201, 4096, %s1199, %s1175, 128, 128, 8
        $region60: #{tpu_custom_call.1} parent=39 // pred_fallthru
          _
        // Predicated region
        $region61: #{tpu_custom_call.1} parent=39 // pred_check
          %p1207 = pneg %p214
        $region62: #{tpu_custom_call.1} parent=39 // pred_check_branch
          %1209 = sbr.rel (%p1207) target = $region64
        $region63: #{tpu_custom_call.1} parent=39 // pred_region
          %s1210 = smul.u32 32, %s37
          %s1212 = ssub.s32 4096, 4096
          %1213 = vsyncadd %s1180, %s1212
          %s1214 = smul.addr %s36, 32
          %s1215 = sadd.s32 %s1210, %s1214
          %s1216 = smul.addr %s1215, 128
          %s1217 = scalar_lea.hbm %s6, %s1216
          %s1218 = sshll.u32 %s1183, 4
          %s1219 = int_to_ptr.vmem [resolvable:$true] %s1218
          %1224 = dma.vmem_to_hbm [thread:$0]  %s1219, 4096, %s1217, %s1180, 128, 128, 8
        $region64: #{tpu_custom_call.1} parent=39 // pred_fallthru
          _
        // Predicated region
        $region65: #{tpu_custom_call.1} parent=39 // pred_check
          %p1225 = pneg %p242
        $region66: #{tpu_custom_call.1} parent=39 // pred_check_branch
          %1227 = sbr.rel (%p1225) target = $region68
        $region67: #{tpu_custom_call.1} parent=39 // pred_region
          %s1228 = smul.u32 32, %s37
          %s1230 = ssub.s32 4096, 4096
          %1231 = vsyncadd %s1185, %s1230
          %s1232 = smul.addr %s36, 32
          %s1233 = sadd.s32 %s1228, %s1232
          %s1234 = smul.addr %s1233, 128
          %s1235 = scalar_lea.hbm %s7, %s1234
          %s1236 = sshll.u32 %s1188, 4
          %s1237 = int_to_ptr.vmem [resolvable:$true] %s1236
          %1242 = dma.vmem_to_hbm [thread:$0]  %s1237, 4096, %s1235, %s1185, 128, 128, 8
        $region68: #{tpu_custom_call.1} parent=39 // pred_fallthru
          _
      $region40: #{tpu_custom_call.1} parent=5 // pred_fallthru
        _
      %p1243 = scmp.le.s32.totalorder 2, %s27
      // Predicated region
      $region69: #{tpu_custom_call.1} parent=5 // pred_check
        %p1244 = pneg %p1243
      $region70: #{tpu_custom_call.1} parent=5 // pred_check_branch
        %1246 = sbr.rel (%p1244) target = $region72
      $region71: #{tpu_custom_call.1} parent=5 // pred_region
        %s1247 = ssub.s32 %s27, 2
        // Predicated region
        $region73: #{tpu_custom_call.1} parent=71 // pred_check
          %p1248 = pneg %p192
        $region74: #{tpu_custom_call.1} parent=71 // pred_check_branch
          %1250 = sbr.rel (%p1248) target = $region76
        $region75: #{tpu_custom_call.1} parent=71 // pred_region
          %s1251 = sand.u32 %s177, 1
          %s1252 = scalar_lea.sflag [#allocation4], %s1251
          %s1253 = sand.u32 %s177, 1
          %s1254 = smul.addr %s1253, 256
          %s1255 = scalar_lea.vmem [#allocation10], %s1254
          %1256 = dma.done %s1252, 4096
        $region76: #{tpu_custom_call.1} parent=71 // pred_fallthru
          _
        // Predicated region
        $region77: #{tpu_custom_call.1} parent=71 // pred_check
          %p1257 = pneg %p220
        $region78: #{tpu_custom_call.1} parent=71 // pred_check_branch
          %1259 = sbr.rel (%p1257) target = $region80
        $region79: #{tpu_custom_call.1} parent=71 // pred_region
          %s1260 = sand.u32 %s33, 1
          %s1261 = scalar_lea.sflag [#allocation12], %s1260
          %s1262 = sand.u32 %s205, 1
          %s1263 = smul.addr %s1262, 256
          %s1264 = scalar_lea.vmem [#allocation11], %s1263
          %1265 = dma.done %s1261, 4096
        $region80: #{tpu_custom_call.1} parent=71 // pred_fallthru
          _
        // Predicated region
        $region81: #{tpu_custom_call.1} parent=71 // pred_check
          %p1266 = pneg %p248
        $region82: #{tpu_custom_call.1} parent=71 // pred_check_branch
          %1268 = sbr.rel (%p1266) target = $region84
        $region83: #{tpu_custom_call.1} parent=71 // pred_region
          %s1269 = sand.u32 %s33, 1
          %s1270 = scalar_lea.sflag [#allocation12], %s1269
          %s1271 = sand.u32 %s233, 1
          %s1272 = smul.addr %s1271, 256
          %s1273 = scalar_lea.vmem [#allocation13], %s1272
          %1274 = dma.done %s1270, 4096
        $region84: #{tpu_custom_call.1} parent=71 // pred_fallthru
          _
      $region72: #{tpu_custom_call.1} parent=5 // pred_fallthru
        _
    $region6: #{tpu_custom_call.1} parent=1 // loop_footer
      %s31 = sadd.s32 1, %s27
    $region7: #{tpu_custom_call.1} parent=1 // loop_footer_branch
      %26 = sbr.rel target = $region3
    $region8: #{tpu_custom_call.1} parent=1 // loop_exit
      _
    %1275 = vsyncpa [#allocation3], 1
    %s1276 = scalar_lea.sflag [#allocation3], 1
    %1277 = vsyncpa %s1276, 1
    %1278 = vsyncpa [#allocation6], 1
    %s1279 = scalar_lea.sflag [#allocation6], 1
    %1280 = vsyncpa %s1279, 1
    %1281 = vsyncpa [#allocation9], 1
    %1282 = vsyncpa [#allocation4], 1
    %s1283 = scalar_lea.sflag [#allocation4], 1
    %1284 = vsyncpa %s1283, 1
    %1285 = vsyncpa [#allocation12], 1
    %s1286 = scalar_lea.sflag [#allocation12], 1
    %1287 = vsyncpa %s1286, 1

</llo_original>
